<compile_context>
chip_gen: v7x
topology: tpu7x:2x2x1
jax: 0.10.0
libtpu: 0.0.40
codegen_flags: <defaults>
</compile_context>

<pallas_src>
import math

import jax
import jax.numpy as jnp
from jax.experimental import pallas as pl
from jax.experimental.pallas import tpu as pltpu

LN_EPS = 1e-6


# ----------------------------------------------------------------------------
# small in-kernel helpers (traced inside the Pallas bodies)
# ----------------------------------------------------------------------------
def _softmax_approx(x):
    m = jnp.max(x, axis=-1, keepdims=True)
    e = jnp.exp(x - m)
    return e * pl.reciprocal(jnp.sum(e, axis=-1, keepdims=True), approx=True)


def _layernorm(x, g, b):
    mean = jnp.mean(x, axis=-1, keepdims=True)
    var = jnp.mean((x - mean) ** 2, axis=-1, keepdims=True)
    return (x - mean) * jax.lax.rsqrt(var + LN_EPS) * g + b


# ----------------------------------------------------------------------------
# single-buffering probe for constant-index weight blocks
# ----------------------------------------------------------------------------
_BUFFERED_OK = None


def _probe_buffered():
    """Check once whether pipeline_mode=pl.Buffered(1) compiles+runs on this JAX."""
    global _BUFFERED_OK
    if _BUFFERED_OK is not None:
        return _BUFFERED_OK

    def k(x_ref, o_ref):
        o_ref[...] = x_ref[...]

    try:
        fn = pl.pallas_call(
            k,
            grid=(2, 2),
            in_specs=[pl.BlockSpec((8, 128), lambda i, j: (0, 0),
                                   pipeline_mode=pl.Buffered(1))],
            out_specs=pl.BlockSpec((8, 128), lambda i, j: (i, 0)),
            out_shape=jax.ShapeDtypeStruct((16, 128), jnp.float32),
            compiler_params=pltpu.CompilerParams(
                dimension_semantics=("parallel", "arbitrary")),
        )
        jax.block_until_ready(fn(jnp.zeros((8, 128), jnp.float32)))
        _BUFFERED_OK = True
    except Exception:
        _BUFFERED_OK = False
    return _BUFFERED_OK


def _spec(block_shape, index_map, *, constant=False):
    """BlockSpec; constant-index (weight) blocks are single-buffered when supported."""
    if constant and _probe_buffered():
        return pl.BlockSpec(block_shape, index_map, pipeline_mode=pl.Buffered(1))
    return pl.BlockSpec(block_shape, index_map)


# ----------------------------------------------------------------------------
# tile-size selection: fold as much as possible while keeping >=2 parallel grid
# steps (v7x megacore has 2 TensorCores; v5e/v6e are unaffected by extra steps).
# ----------------------------------------------------------------------------
def _pick_batch_tile(B, S, max_rows=512):
    bt = max(1, B // 2)
    while bt > 1 and (B % bt != 0 or bt * S > max_rows):
        bt -= 1
    return bt


def _pick_token_tile(N, max_tile=256):
    if N % 8 != 0:
        return N
    t = min(max_tile, N)
    t -= t % 8
    while N % t != 0:
        t -= 8
    if t == N and N >= 16 and (N // 2) % 8 == 0:
        t = N // 2                      # keep 2 parallel token tiles for v7x megacore
    return t


# ----------------------------------------------------------------------------
# Pallas kernel 1: one fused decoder layer (masked MHA + residual LN + FFN + LN)
# grid = (B // bt,) ; each grid step handles bt batch rows = bt*S token rows, so
# the big matmuls run over bt*S-row M dimensions; only the tiny per-(batch,head)
# attention math loops inside.
# ----------------------------------------------------------------------------
def make_decoder_kernel(n_heads, d_k, d_v, batch_tile, seq_len, return_attn):
    H, dk, dv, bt, S = n_heads, d_k, d_v, batch_tile, seq_len
    hk = H * dk
    scale = 1.0 / math.sqrt(dk)

    def kernel(x_ref, madd_ref,
               wqkv_ref, bqkv_ref, wo_ref, bo_ref,
               g1_ref, be1_ref, w1_ref, bf1_ref, w2_ref, bf2_ref,
               g2_ref, be2_ref, *out_refs):
        out_ref = out_refs[0]
        attn_ref = out_refs[1] if return_attn else None

        x = x_ref[...]                              # (bt*S, D) f32
        x_bf = x.astype(jnp.bfloat16)

        # ---- fused QKV projection over ALL bt*S rows: one wide MXU matmul ----
        qkv = jnp.dot(x_bf, wqkv_ref[...],
                      preferred_element_type=jnp.float32) + bqkv_ref[...]
        q = qkv[:, :hk]
        k = qkv[:, hk:2 * hk]
        v = qkv[:, 2 * hk:]

        # ---- per-batch-row, per-head attention (static tiny loops) ----
        ctx_rows = []
        for b in range(bt):
            r0 = b * S
            qb = q[r0:r0 + S, :]
            kb = k[r0:r0 + S, :]
            vb = v[r0:r0 + S, :]
            madd = madd_ref[b]                      # (S, S) additive mask (-1e9 masked)

            sc = []
            for h in range(H):
                qh = qb[:, h * dk:(h + 1) * dk].astype(jnp.bfloat16)
                kh = kb[:, h * dk:(h + 1) * dk].astype(jnp.bfloat16)
                sc.append(jnp.dot(qh, kh.T,
                                  preferred_element_type=jnp.float32) * scale + madd)
            scores = jnp.concatenate(sc, axis=0)    # (H*S, S) — heads stacked on sublanes
            p = _softmax_approx(scores)             # one softmax over all heads

            if return_attn:
                # single bf16 slab store per batch row (wrapper reshapes to (B,H,S,S))
                attn_ref[b] = p.astype(jnp.bfloat16)

            cparts = []
            for h in range(H):
                ph = p[h * S:(h + 1) * S, :].astype(jnp.bfloat16)
                vh = vb[:, h * dv:(h + 1) * dv].astype(jnp.bfloat16)
                cparts.append(jnp.dot(ph, vh, preferred_element_type=jnp.float32))
            ctx_rows.append(jnp.concatenate(cparts, axis=-1))      # (S, H*dv)

        ctx = ctx_rows[0] if bt == 1 else jnp.concatenate(ctx_rows, axis=0)  # (bt*S, H*dv)

        # ---- ONE output projection for all rows, residual+LN, FFN, residual+LN ----
        proj = jnp.dot(ctx.astype(jnp.bfloat16), wo_ref[...],
                       preferred_element_type=jnp.float32) + bo_ref[...]
        y = _layernorm(x + proj, g1_ref[...], be1_ref[...])
        h1 = jnp.maximum(
            jnp.dot(y.astype(jnp.bfloat16), w1_ref[...],
                    preferred_element_type=jnp.float32) + bf1_ref[...], 0.0)
        h2 = jnp.dot(h1.astype(jnp.bfloat16), w2_ref[...],
                     preferred_element_type=jnp.float32) + bf2_ref[...]
        out_ref[...] = _layernorm(y + h2, g2_ref[...], be2_ref[...])

    return kernel


def decoder_layer(x_flat, mask_add, lp, *, n_heads, d_k, d_v,
                  batch, seq_len, batch_tile, return_attn):
    B, S, D = batch, seq_len, x_flat.shape[-1]
    bt = batch_tile
    rows = bt * S
    H = n_heads
    kernel = make_decoder_kernel(n_heads, d_k, d_v, bt, S, return_attn)

    weights = [lp['w_qkv'], lp['b_qkv'], lp['wo'], lp['bo'],
               lp['ln1_g'], lp['ln1_b'], lp['w1'], lp['b1'],
               lp['w2'], lp['b2'], lp['ln2_g'], lp['ln2_b']]

    def wspec(arr):
        nd = arr.ndim
        return _spec(arr.shape, lambda i, _nd=nd: (0,) * _nd, constant=True)

    in_specs = ([pl.BlockSpec((rows, D), lambda i: (i, 0)),
                 pl.BlockSpec((bt, S, S), lambda i: (i, 0, 0))]
                + [wspec(w) for w in weights])
    out_specs = [pl.BlockSpec((rows, D), lambda i: (i, 0))]
    out_shape = [jax.ShapeDtypeStruct((B * S, D), jnp.float32)]
    if return_attn:
        out_specs.append(pl.BlockSpec((bt, H * S, S), lambda i: (i, 0, 0)))
        out_shape.append(jax.ShapeDtypeStruct((B, H * S, S), jnp.bfloat16))

    outs = pl.pallas_call(
        kernel,
        grid=(B // bt,),
        in_specs=in_specs,
        out_specs=out_specs,
        out_shape=out_shape,
        compiler_params=pltpu.CompilerParams(
            dimension_semantics=("parallel",),
            vmem_limit_bytes=64 * 1024 * 1024),
    )(x_flat, mask_add, *weights)

    if return_attn:
        return outs[0], outs[1].reshape(B, H, S, S)
    return outs[0], None


# ----------------------------------------------------------------------------
# Pallas kernel 2a: MoS expert prior, computed ONCE per token (hoisted out of
# the expert loop). Output (N, E) softmaxed prior probabilities.
# ----------------------------------------------------------------------------
def mos_prior_kernel(x_ref, wprior_ref, out_ref):
    logit = jnp.dot(x_ref[...].astype(jnp.bfloat16), wprior_ref[...],
                    preferred_element_type=jnp.float32)
    out_ref[...] = _softmax_approx(logit)


# ----------------------------------------------------------------------------
# Pallas kernel 2b: Mixture-of-Softmaxes accumulation, grid = (token tiles, experts).
# Output block is resident across the (innermost, "arbitrary") expert axis; the
# prior arrives pre-transposed as (E, N, 1) so each step reads its column directly.
# ----------------------------------------------------------------------------
def mos_mix_kernel(x_ref, prior_ref, wlat_ref, blat_ref, wdec_ref, bdec_ref, out_ref):
    e_idx = pl.program_id(1)

    @pl.when(e_idx == 0)
    def _init():
        out_ref[...] = jnp.zeros_like(out_ref)

    x_bf = x_ref[...].astype(jnp.bfloat16)                      # (tn, D)
    lat = jnp.tanh(jnp.dot(x_bf, wlat_ref[0],
                           preferred_element_type=jnp.float32) + blat_ref[0])
    logit = jnp.dot(lat.astype(jnp.bfloat16), wdec_ref[...],
                    preferred_element_type=jnp.float32) + bdec_ref[...]   # (tn, V)

    out_ref[...] += prior_ref[0] * _softmax_approx(logit)       # prior_ref[0]: (tn, 1)

    @pl.when(e_idx == pl.num_programs(1) - 1)
    def _finalize():
        out_ref[...] = jnp.log(out_ref[...] + 1e-8)             # log(prob.add_(1e-8))


def mos_head(x_flat, hp, *, n_experts, voc_size):
    N, D = x_flat.shape
    E = n_experts
    tn = _pick_token_tile(N)
    n_tiles = N // tn

    # prior over experts: one small Pallas kernel over all tokens (no per-expert recompute)
    prior = pl.pallas_call(
        mos_prior_kernel,
        grid=(n_tiles,),
        in_specs=[pl.BlockSpec((tn, D), lambda i: (i, 0)),
                  _spec(hp['w_prior'].shape, lambda i: (0, 0), constant=True)],
        out_specs=pl.BlockSpec((tn, E), lambda i: (i, 0)),
        out_shape=jax.ShapeDtypeStruct((N, E), jnp.float32),
        compiler_params=pltpu.CompilerParams(dimension_semantics=("parallel",)),
    )(x_flat, hp['w_prior'])
    prior_t = jnp.transpose(prior)[:, :, None]          # (E, N, 1): column-sliceable layout

    in_specs = [
        pl.BlockSpec((tn, D), lambda i, e: (i, 0)),              # token tile
        pl.BlockSpec((1, tn, 1), lambda i, e: (e, i, 0)),        # this expert's prior column
        pl.BlockSpec((1, D, D), lambda i, e: (e, 0, 0)),         # per-expert latent W
        pl.BlockSpec((1, 1, D), lambda i, e: (e, 0, 0)),         # per-expert latent b
        _spec(hp['w_dec'].shape, lambda i, e: (0, 0), constant=True),   # (D, V)
        _spec(hp['b_dec'].shape, lambda i, e: (0, 0), constant=True),   # (1, V)
    ]
    out_specs = pl.BlockSpec((tn, voc_size), lambda i, e: (i, 0))

    return pl.pallas_call(
        mos_mix_kernel,
        grid=(n_tiles, E),
        in_specs=in_specs,
        out_specs=out_specs,
        out_shape=jax.ShapeDtypeStruct((N, voc_size), jnp.float32),
        compiler_params=pltpu.CompilerParams(
            dimension_semantics=("parallel", "arbitrary"),
            vmem_limit_bytes=64 * 1024 * 1024),
    )(x_flat, prior_t, hp['w_lat'], hp['b_lat'], hp['w_dec'], hp['b_dec'])


# ----------------------------------------------------------------------------
# plain-JAX glue: embeddings, positional encoding, masks, layer loop
# ----------------------------------------------------------------------------
def make_pos_table(max_pos, d_model):
    pos = jnp.arange(1, max_pos + 1, dtype=jnp.float32)[:, None]
    j = jnp.arange(d_model)
    angle = pos / jnp.power(10000.0, (2.0 * (j // 2)) / d_model)
    pe = jnp.where(j % 2 == 0, jnp.sin(angle), jnp.cos(angle))
    return jnp.concatenate([jnp.zeros((1, d_model), jnp.float32),
                            pe.astype(jnp.float32)], axis=0)   # row 0 = pad


def lm_transformer_forward(params, dec_inputs, dec_inputs_len, cfg, return_attn=False):
    B, S = dec_inputs.shape
    D = cfg['d_model']
    H = cfg['n_heads']

    # embedding + positional encoding (dropout is identity in eval mode)
    emb = params['tgt_emb'][dec_inputs]                             # (B, S, D)
    ar = jnp.arange(1, S + 1, dtype=jnp.int32)[None, :]
    pos_idx = jnp.where(ar <= dec_inputs_len[:, None], ar, 0)       # (B, S)
    x = emb + params['pos_enc'][pos_idx]

    # additive self-attention mask: pad (tokens == -1) | causal -> -1e9 where masked
    pad_mask = (dec_inputs == -1)[:, None, :]                       # (B, 1, S)
    sub_mask = jnp.triu(jnp.ones((S, S), dtype=bool), k=1)[None]    # (1, S, S)
    mask_add = jnp.where(pad_mask | sub_mask, -1e9, 0.0).astype(jnp.float32)  # (B, S, S)

    bt = _pick_batch_tile(B, S)
    x_flat = x.reshape(B * S, D)                                    # batch folded into M

    dec_self_attns = []
    for lp in params['layers']:
        x_flat, attn = decoder_layer(x_flat, mask_add, lp,
                                     n_heads=H, d_k=cfg['d_k'], d_v=cfg['d_v'],
                                     batch=B, seq_len=S, batch_tile=bt,
                                     return_attn=return_attn)
        if return_attn:
            dec_self_attns.append(attn)

    log_prob = mos_head(x_flat, params['head'],
                        n_experts=cfg['n_experts'],
                        voc_size=cfg['tgt_vocab_size'])             # (B*S, V)
    return log_prob, dec_self_attns


# ----------------------------------------------------------------------------
# deterministic parameter init (synthetic; shapes follow the torch module)
# matmul weights stored bf16 (MXU), biases / LN params / tables f32.
# ----------------------------------------------------------------------------
def init_params(key, cfg):
    D, dff = cfg['d_model'], cfg['d_ff']
    H, dk, dv = cfg['n_heads'], cfg['d_k'], cfg['d_v']
    V, E = cfg['tgt_vocab_size'], cfg['n_experts']
    keys = iter(jax.random.split(key, 64))
    bf16 = jnp.bfloat16

    def nrm(shape, scale=0.05, dtype=jnp.float32):
        return (scale * jax.random.normal(next(keys), shape)).astype(dtype)

    params = {
        'tgt_emb': nrm((V, D), 1.0),
        'pos_enc': make_pos_table(cfg['max_tgt_seq_len'] * 10, D),
        'layers': [],
        'head': {
            'w_prior': nrm((D, E), dtype=bf16),      # prior: Linear(D,E,bias=False)
            'w_lat': nrm((E, D, D), dtype=bf16),     # latent: Linear(D,E*D)+Tanh, per-expert slabs
            'b_lat': nrm((E, 1, D)),
            'w_dec': nrm((D, V), dtype=bf16),        # decoder: Linear(D, V)
            'b_dec': nrm((1, V)),
        },
    }
    qkv_out = 2 * H * dk + H * dv
    for _ in range(cfg['n_layers']):
        params['layers'].append({
            'w_qkv': nrm((D, qkv_out), dtype=bf16),  # fused [Wq | Wk | Wv]
            'b_qkv': nrm((1, qkv_out)),
            'wo': nrm((H * dv, D), dtype=bf16), 'bo': nrm((1, D)),
            'ln1_g': jnp.ones((1, D), jnp.float32), 'ln1_b': jnp.zeros((1, D), jnp.float32),
            'w1': nrm((D, dff), dtype=bf16), 'b1': nrm((1, dff)),
            'w2': nrm((dff, D), dtype=bf16), 'b2': nrm((1, D)),
            'ln2_g': jnp.ones((1, D), jnp.float32), 'ln2_b': jnp.zeros((1, D), jnp.float32),
        })
    # NOTE: self.tgt_proj (Linear(D, V, bias=False)) is never used in forward(); omitted.
    return params


# ----------------------------------------------------------------------------
if __name__ == "__main__":
    cfg = dict(n_layers=2, d_k=16, d_v=16, d_model=32, d_ff=64, n_heads=2,
               max_tgt_seq_len=8, tgt_vocab_size=64, n_experts=4)
    B, S = 2, 8

    key = jax.random.PRNGKey(0)
    pkey, dkey = jax.random.split(key)
    params = init_params(pkey, cfg)

    dec_inputs = jax.random.randint(dkey, (B, S), 0, cfg['tgt_vocab_size'], dtype=jnp.int32)
    dec_inputs_len = jnp.array([S, S - 2], dtype=jnp.int32)

    # fast path: no [B,H,S,S] attention writeback (default serving path)
    logits_fast, attns_fast = lm_transformer_forward(
        params, dec_inputs, dec_inputs_len, cfg, return_attn=False)
    logits_fast = jax.block_until_ready(logits_fast)
    assert attns_fast == []

    # full path with attention maps (bf16 slab writeback)
    dec_logits, dec_self_attns = lm_transformer_forward(
        params, dec_inputs, dec_inputs_len, cfg, return_attn=True)
    dec_logits = jax.block_until_ready(dec_logits)

    assert dec_logits.shape == (B * S, cfg['tgt_vocab_size'])
    assert dec_logits.dtype == jnp.float32
    assert len(dec_self_attns) == cfg['n_layers']
    assert dec_self_attns[0].shape == (B, cfg['n_heads'], S, S)
    assert bool(jnp.all(jnp.isfinite(dec_logits)))
    assert bool(jnp.allclose(dec_logits, logits_fast, atol=1e-3, rtol=1e-3))
    # MoS output is a mixture of softmaxes -> rows of exp(logits) sum to ~1.
    row_sums = jnp.sum(jnp.exp(dec_logits), axis=-1)
    assert bool(jnp.all(jnp.abs(row_sums - 1.0) < 3e-3))

    print("KERNEL_OK")
</pallas_src>

<mosaic_0001>
module attributes {stable_mosaic.version = 11 : i64} {
  func.func @k(%arg0: i32, %arg1: i32, %arg2: memref<8x128xf32, #tpu.memory_space<vmem>>, %arg3: memref<8x128xf32, #tpu.memory_space<vmem>>) attributes {dimension_semantics = [#tpu.dimension_semantics<parallel>, #tpu.dimension_semantics<arbitrary>], iteration_bounds = array<i64: 2, 2>, scalar_prefetch = 0 : i64, scratch_operands = 0 : i64, tpu.core_type = #tpu.core_type<tc>, window_params = [{pipeline_mode = #tpu.pipeline_mode<synchronous>, transform_indices = @transform_0, window_bounds = array<i64: 8, 128>}, {transform_indices = @transform_1, window_bounds = array<i64: 8, 128>}]} {
    %c0 = arith.constant 0 : index
    %c0_0 = arith.constant 0 : index
    %0 = vector.load %arg2[%c0, %c0_0] : memref<8x128xf32, #tpu.memory_space<vmem>>, vector<8x128xf32>
    %c0_1 = arith.constant 0 : index
    %c0_2 = arith.constant 0 : index
    %1 = vector.load %arg3[%c0_1, %c0_2] : memref<8x128xf32, #tpu.memory_space<vmem>>, vector<8x128xf32>
    tpu.vector_store %arg3[%c0_1, %c0_2], %0 {strides = array<i32>} : memref<8x128xf32, #tpu.memory_space<vmem>>, vector<8x128xf32>,
    return
  }
  func.func @transform_0(%arg0: i32, %arg1: i32) -> (i32, i32) {
    %c0_i32 = arith.constant 0 : i32
    %c0_i32_0 = arith.constant 0 : i32
    %c0_i32_1 = arith.constant 0 : i32
    return %c0_i32, %c0_i32_0 : i32, i32
  }
  func.func @transform_1(%arg0: i32, %arg1: i32) -> (i32, i32) {
    %c0_i32 = arith.constant 0 : i32
    %c0_i32_0 = arith.constant 0 : i32
    return %arg0, %c0_i32 : i32, i32
  }
}

module attributes {stable_mosaic.version = 11 : i64} {
  func.func @kernel(%arg0: i32, %arg1: memref<8x32xf32, #tpu.memory_space<vmem>>, %arg2: memref<1x8x8xf32, #tpu.memory_space<vmem>>, %arg3: memref<32x96xbf16, #tpu.memory_space<vmem>>, %arg4: memref<1x96xf32, #tpu.memory_space<vmem>>, %arg5: memref<32x32xbf16, #tpu.memory_space<vmem>>, %arg6: memref<1x32xf32, #tpu.memory_space<vmem>>, %arg7: memref<1x32xf32, #tpu.memory_space<vmem>>, %arg8: memref<1x32xf32, #tpu.memory_space<vmem>>, %arg9: memref<32x64xbf16, #tpu.memory_space<vmem>>, %arg10: memref<1x64xf32, #tpu.memory_space<vmem>>, %arg11: memref<64x32xbf16, #tpu.memory_space<vmem>>, %arg12: memref<1x32xf32, #tpu.memory_space<vmem>>, %arg13: memref<1x32xf32, #tpu.memory_space<vmem>>, %arg14: memref<1x32xf32, #tpu.memory_space<vmem>>, %arg15: memref<8x32xf32, #tpu.memory_space<vmem>>) attributes {dimension_semantics = [#tpu.dimension_semantics<parallel>], iteration_bounds = array<i64: 2>, scalar_prefetch = 0 : i64, scratch_operands = 0 : i64, tpu.core_type = #tpu.core_type<tc>, window_params = [{transform_indices = @transform_0, window_bounds = array<i64: 8, 32>}, {transform_indices = @transform_1, window_bounds = array<i64: 1, 8, 8>}, {pipeline_mode = #tpu.pipeline_mode<synchronous>, transform_indices = @transform_2, window_bounds = array<i64: 32, 96>}, {pipeline_mode = #tpu.pipeline_mode<synchronous>, transform_indices = @transform_3, window_bounds = array<i64: 1, 96>}, {pipeline_mode = #tpu.pipeline_mode<synchronous>, transform_indices = @transform_4, window_bounds = array<i64: 32, 32>}, {pipeline_mode = #tpu.pipeline_mode<synchronous>, transform_indices = @transform_5, window_bounds = array<i64: 1, 32>}, {pipeline_mode = #tpu.pipeline_mode<synchronous>, transform_indices = @transform_6, window_bounds = array<i64: 1, 32>}, {pipeline_mode = #tpu.pipeline_mode<synchronous>, transform_indices = @transform_7, window_bounds = array<i64: 1, 32>}, {pipeline_mode = #tpu.pipeline_mode<synchronous>, transform_indices = @transform_8, window_bounds = array<i64: 32, 64>}, {pipeline_mode = #tpu.pipeline_mode<synchronous>, transform_indices = @transform_9, window_bounds = array<i64: 1, 64>}, {pipeline_mode = #tpu.pipeline_mode<synchronous>, transform_indices = @transform_10, window_bounds = array<i64: 64, 32>}, {pipeline_mode = #tpu.pipeline_mode<synchronous>, transform_indices = @transform_11, window_bounds = array<i64: 1, 32>}, {pipeline_mode = #tpu.pipeline_mode<synchronous>, transform_indices = @transform_12, window_bounds = array<i64: 1, 32>}, {pipeline_mode = #tpu.pipeline_mode<synchronous>, transform_indices = @transform_13, window_bounds = array<i64: 1, 32>}, {transform_indices = @transform_14, window_bounds = array<i64: 8, 32>}]} {
    %c0 = arith.constant 0 : index
    %c0_0 = arith.constant 0 : index
    %0 = vector.load %arg1[%c0, %c0_0] : memref<8x32xf32, #tpu.memory_space<vmem>>, vector<8x32xf32>
    %1 = arith.truncf %0 : vector<8x32xf32> to vector<8x32xbf16>
    %c0_1 = arith.constant 0 : index
    %c0_2 = arith.constant 0 : index
    %2 = vector.load %arg3[%c0_1, %c0_2] : memref<32x96xbf16, #tpu.memory_space<vmem>>, vector<32x96xbf16>
    %cst = arith.constant dense<0.000000e+00> : vector<8x96xf32>
    %3 = tpu.matmul %1, %2, %cst {dimension_numbers = #tpu.dot_dimension_numbers<[1], [0], [0], [1], [0, 0, 1, 1], [], []>} : vector<8x32xbf16>, vector<32x96xbf16>, vector<8x96xf32> -> vector<8x96xf32>
    %c0_3 = arith.constant 0 : index
    %c0_4 = arith.constant 0 : index
    %4 = vector.load %arg4[%c0_3, %c0_4] : memref<1x96xf32, #tpu.memory_space<vmem>>, vector<1x96xf32>
    %5 = vector.broadcast %4 : vector<1x96xf32> to vector<8x96xf32>
    %6 = arith.addf %3, %5 : vector<8x96xf32>
    %7 = vector.extract_strided_slice %6 {offsets = [0, 0], sizes = [8, 32], strides = [1, 1]} : vector<8x96xf32> to vector<8x32xf32>
    %8 = vector.extract_strided_slice %6 {offsets = [0, 32], sizes = [8, 32], strides = [1, 1]} : vector<8x96xf32> to vector<8x32xf32>
    %9 = vector.extract_strided_slice %6 {offsets = [0, 64], sizes = [8, 32], strides = [1, 1]} : vector<8x96xf32> to vector<8x32xf32>
    %c0_5 = arith.constant 0 : index
    %c0_6 = arith.constant 0 : index
    %c0_7 = arith.constant 0 : index
    %10 = vector.load %arg2[%c0_5, %c0_6, %c0_7] : memref<1x8x8xf32, #tpu.memory_space<vmem>>, vector<1x8x8xf32>
    %11 = vector.shape_cast %10 : vector<1x8x8xf32> to vector<8x8xf32>
    %12 = vector.extract_strided_slice %7 {offsets = [0, 0], sizes = [8, 16], strides = [1, 1]} : vector<8x32xf32> to vector<8x16xf32>
    %13 = arith.truncf %12 : vector<8x16xf32> to vector<8x16xbf16>
    %14 = vector.extract_strided_slice %8 {offsets = [0, 0], sizes = [8, 16], strides = [1, 1]} : vector<8x32xf32> to vector<8x16xf32>
    %15 = arith.truncf %14 : vector<8x16xf32> to vector<8x16xbf16>
    %16 = tpu.transpose %15, [1, 0] : vector<8x16xbf16> -> vector<16x8xbf16>
    %cst_8 = arith.constant dense<0.000000e+00> : vector<8x8xf32>
    %17 = tpu.matmul %13, %16, %cst_8 {dimension_numbers = #tpu.dot_dimension_numbers<[1], [0], [0], [1], [0, 0, 1, 1], [], []>} : vector<8x16xbf16>, vector<16x8xbf16>, vector<8x8xf32> -> vector<8x8xf32>
    %cst_9 = arith.constant 2.500000e-01 : f32
    %18 = vector.broadcast %cst_9 : f32 to vector<8x8xf32>
    %19 = arith.mulf %17, %18 : vector<8x8xf32>
    %20 = arith.addf %19, %11 : vector<8x8xf32>
    %21 = vector.extract_strided_slice %7 {offsets = [0, 16], sizes = [8, 16], strides = [1, 1]} : vector<8x32xf32> to vector<8x16xf32>
    %22 = arith.truncf %21 : vector<8x16xf32> to vector<8x16xbf16>
    %23 = vector.extract_strided_slice %8 {offsets = [0, 16], sizes = [8, 16], strides = [1, 1]} : vector<8x32xf32> to vector<8x16xf32>
    %24 = arith.truncf %23 : vector<8x16xf32> to vector<8x16xbf16>
    %25 = tpu.transpose %24, [1, 0] : vector<8x16xbf16> -> vector<16x8xbf16>
    %cst_10 = arith.constant dense<0.000000e+00> : vector<8x8xf32>
    %26 = tpu.matmul %22, %25, %cst_10 {dimension_numbers = #tpu.dot_dimension_numbers<[1], [0], [0], [1], [0, 0, 1, 1], [], []>} : vector<8x16xbf16>, vector<16x8xbf16>, vector<8x8xf32> -> vector<8x8xf32>
    %cst_11 = arith.constant 2.500000e-01 : f32
    %27 = vector.broadcast %cst_11 : f32 to vector<8x8xf32>
    %28 = arith.mulf %26, %27 : vector<8x8xf32>
    %29 = arith.addf %28, %11 : vector<8x8xf32>
    %30 = tpu.concatenate %20, %29 in 0 : vector<8x8xf32>, vector<8x8xf32> -> vector<16x8xf32>
    %cst_12 = arith.constant dense<0xFF800000> : vector<16xf32>
    %31 = vector.multi_reduction <maximumf>, %30, %cst_12 [1] : vector<16x8xf32> to vector<16xf32>
    %32 = vector.shape_cast %31 : vector<16xf32> to vector<16x1xf32>
    %33 = vector.broadcast %32 : vector<16x1xf32> to vector<16x8xf32>
    %34 = arith.subf %30, %33 : vector<16x8xf32>
    %35 = math.exp %34 : vector<16x8xf32>
    %cst_13 = arith.constant dense<0.000000e+00> : vector<16xf32>
    %36 = vector.multi_reduction <add>, %35, %cst_13 [1] : vector<16x8xf32> to vector<16xf32>
    %37 = vector.shape_cast %36 : vector<16xf32> to vector<16x1xf32>
    %38 = tpu.reciprocal %37 {approx = true} : vector<16x1xf32> -> vector<16x1xf32>
    %39 = vector.broadcast %38 : vector<16x1xf32> to vector<16x8xf32>
    %40 = arith.mulf %35, %39 : vector<16x8xf32>
    %41 = vector.extract_strided_slice %40 {offsets = [0, 0], sizes = [8, 8], strides = [1, 1]} : vector<16x8xf32> to vector<8x8xf32>
    %42 = arith.truncf %41 : vector<8x8xf32> to vector<8x8xbf16>
    %43 = vector.extract_strided_slice %9 {offsets = [0, 0], sizes = [8, 16], strides = [1, 1]} : vector<8x32xf32> to vector<8x16xf32>
    %44 = arith.truncf %43 : vector<8x16xf32> to vector<8x16xbf16>
    %cst_14 = arith.constant dense<0.000000e+00> : vector<8x16xf32>
    %45 = tpu.matmul %42, %44, %cst_14 {dimension_numbers = #tpu.dot_dimension_numbers<[1], [0], [0], [1], [0, 0, 1, 1], [], []>} : vector<8x8xbf16>, vector<8x16xbf16>, vector<8x16xf32> -> vector<8x16xf32>
    %46 = vector.extract_strided_slice %40 {offsets = [8, 0], sizes = [8, 8], strides = [1, 1]} : vector<16x8xf32> to vector<8x8xf32>
    %47 = arith.truncf %46 : vector<8x8xf32> to vector<8x8xbf16>
    %48 = vector.extract_strided_slice %9 {offsets = [0, 16], sizes = [8, 16], strides = [1, 1]} : vector<8x32xf32> to vector<8x16xf32>
    %49 = arith.truncf %48 : vector<8x16xf32> to vector<8x16xbf16>
    %cst_15 = arith.constant dense<0.000000e+00> : vector<8x16xf32>
    %50 = tpu.matmul %47, %49, %cst_15 {dimension_numbers = #tpu.dot_dimension_numbers<[1], [0], [0], [1], [0, 0, 1, 1], [], []>} : vector<8x8xbf16>, vector<8x16xbf16>, vector<8x16xf32> -> vector<8x16xf32>
    %51 = tpu.concatenate %45, %50 in 1 : vector<8x16xf32>, vector<8x16xf32> -> vector<8x32xf32>
    %52 = arith.truncf %51 : vector<8x32xf32> to vector<8x32xbf16>
    %c0_16 = arith.constant 0 : index
    %c0_17 = arith.constant 0 : index
    %53 = vector.load %arg5[%c0_16, %c0_17] : memref<32x32xbf16, #tpu.memory_space<vmem>>, vector<32x32xbf16>
    %cst_18 = arith.constant dense<0.000000e+00> : vector<8x32xf32>
    %54 = tpu.matmul %52, %53, %cst_18 {dimension_numbers = #tpu.dot_dimension_numbers<[1], [0], [0], [1], [0, 0, 1, 1], [], []>} : vector<8x32xbf16>, vector<32x32xbf16>, vector<8x32xf32> -> vector<8x32xf32>
    %c0_19 = arith.constant 0 : index
    %c0_20 = arith.constant 0 : index
    %55 = vector.load %arg6[%c0_19, %c0_20] : memref<1x32xf32, #tpu.memory_space<vmem>>, vector<1x32xf32>
    %56 = vector.broadcast %55 : vector<1x32xf32> to vector<8x32xf32>
    %57 = arith.addf %54, %56 : vector<8x32xf32>
    %58 = arith.addf %0, %57 : vector<8x32xf32>
    %c0_21 = arith.constant 0 : index
    %c0_22 = arith.constant 0 : index
    %59 = vector.load %arg7[%c0_21, %c0_22] : memref<1x32xf32, #tpu.memory_space<vmem>>, vector<1x32xf32>
    %c0_23 = arith.constant 0 : index
    %c0_24 = arith.constant 0 : index
    %60 = vector.load %arg8[%c0_23, %c0_24] : memref<1x32xf32, #tpu.memory_space<vmem>>, vector<1x32xf32>
    %cst_25 = arith.constant dense<0.000000e+00> : vector<8xf32>
    %61 = vector.multi_reduction <add>, %58, %cst_25 [1] : vector<8x32xf32> to vector<8xf32>
    %62 = vector.shape_cast %61 : vector<8xf32> to vector<8x1xf32>
    %cst_26 = arith.constant 3.200000e+01 : f32
    %63 = vector.broadcast %cst_26 : f32 to vector<8x1xf32>
    %64 = arith.divf %62, %63 : vector<8x1xf32>
    %65 = vector.broadcast %64 : vector<8x1xf32> to vector<8x32xf32>
    %66 = arith.subf %58, %65 : vector<8x32xf32>
    %67 = arith.mulf %66, %66 : vector<8x32xf32>
    %cst_27 = arith.constant dense<0.000000e+00> : vector<8xf32>
    %68 = vector.multi_reduction <add>, %67, %cst_27 [1] : vector<8x32xf32> to vector<8xf32>
    %69 = vector.shape_cast %68 : vector<8xf32> to vector<8x1xf32>
    %cst_28 = arith.constant 3.200000e+01 : f32
    %70 = vector.broadcast %cst_28 : f32 to vector<8x1xf32>
    %71 = arith.divf %69, %70 : vector<8x1xf32>
    %72 = vector.broadcast %64 : vector<8x1xf32> to vector<8x32xf32>
    %73 = arith.subf %58, %72 : vector<8x32xf32>
    %cst_29 = arith.constant 9.99999997E-7 : f32
    %74 = vector.broadcast %cst_29 : f32 to vector<8x1xf32>
    %75 = arith.addf %71, %74 : vector<8x1xf32>
    %76 = math.rsqrt %75 : vector<8x1xf32>
    %77 = vector.broadcast %76 : vector<8x1xf32> to vector<8x32xf32>
    %78 = arith.mulf %73, %77 : vector<8x32xf32>
    %79 = vector.broadcast %59 : vector<1x32xf32> to vector<8x32xf32>
    %80 = arith.mulf %78, %79 : vector<8x32xf32>
    %81 = vector.broadcast %60 : vector<1x32xf32> to vector<8x32xf32>
    %82 = arith.addf %80, %81 : vector<8x32xf32>
    %83 = arith.truncf %82 : vector<8x32xf32> to vector<8x32xbf16>
    %c0_30 = arith.constant 0 : index
    %c0_31 = arith.constant 0 : index
    %84 = vector.load %arg9[%c0_30, %c0_31] : memref<32x64xbf16, #tpu.memory_space<vmem>>, vector<32x64xbf16>
    %cst_32 = arith.constant dense<0.000000e+00> : vector<8x64xf32>
    %85 = tpu.matmul %83, %84, %cst_32 {dimension_numbers = #tpu.dot_dimension_numbers<[1], [0], [0], [1], [0, 0, 1, 1], [], []>} : vector<8x32xbf16>, vector<32x64xbf16>, vector<8x64xf32> -> vector<8x64xf32>
    %c0_33 = arith.constant 0 : index
    %c0_34 = arith.constant 0 : index
    %86 = vector.load %arg10[%c0_33, %c0_34] : memref<1x64xf32, #tpu.memory_space<vmem>>, vector<1x64xf32>
    %87 = vector.broadcast %86 : vector<1x64xf32> to vector<8x64xf32>
    %88 = arith.addf %85, %87 : vector<8x64xf32>
    %cst_35 = arith.constant 0.000000e+00 : f32
    %89 = vector.broadcast %cst_35 : f32 to vector<8x64xf32>
    %90 = arith.maximumf %88, %89 : vector<8x64xf32>
    %91 = arith.truncf %90 : vector<8x64xf32> to vector<8x64xbf16>
    %c0_36 = arith.constant 0 : index
    %c0_37 = arith.constant 0 : index
    %92 = vector.load %arg11[%c0_36, %c0_37] : memref<64x32xbf16, #tpu.memory_space<vmem>>, vector<64x32xbf16>
    %cst_38 = arith.constant dense<0.000000e+00> : vector<8x32xf32>
    %93 = tpu.matmul %91, %92, %cst_38 {dimension_numbers = #tpu.dot_dimension_numbers<[1], [0], [0], [1], [0, 0, 1, 1], [], []>} : vector<8x64xbf16>, vector<64x32xbf16>, vector<8x32xf32> -> vector<8x32xf32>
    %c0_39 = arith.constant 0 : index
    %c0_40 = arith.constant 0 : index
    %94 = vector.load %arg12[%c0_39, %c0_40] : memref<1x32xf32, #tpu.memory_space<vmem>>, vector<1x32xf32>
    %95 = vector.broadcast %94 : vector<1x32xf32> to vector<8x32xf32>
    %96 = arith.addf %93, %95 : vector<8x32xf32>
    %97 = arith.addf %82, %96 : vector<8x32xf32>
    %c0_41 = arith.constant 0 : index
    %c0_42 = arith.constant 0 : index
    %98 = vector.load %arg13[%c0_41, %c0_42] : memref<1x32xf32, #tpu.memory_space<vmem>>, vector<1x32xf32>
    %c0_43 = arith.constant 0 : index
    %c0_44 = arith.constant 0 : index
    %99 = vector.load %arg14[%c0_43, %c0_44] : memref<1x32xf32, #tpu.memory_space<vmem>>, vector<1x32xf32>
    %cst_45 = arith.constant dense<0.000000e+00> : vector<8xf32>
    %100 = vector.multi_reduction <add>, %97, %cst_45 [1] : vector<8x32xf32> to vector<8xf32>
    %101 = vector.shape_cast %100 : vector<8xf32> to vector<8x1xf32>
    %cst_46 = arith.constant 3.200000e+01 : f32
    %102 = vector.broadcast %cst_46 : f32 to vector<8x1xf32>
    %103 = arith.divf %101, %102 : vector<8x1xf32>
    %104 = vector.broadcast %103 : vector<8x1xf32> to vector<8x32xf32>
    %105 = arith.subf %97, %104 : vector<8x32xf32>
    %106 = arith.mulf %105, %105 : vector<8x32xf32>
    %cst_47 = arith.constant dense<0.000000e+00> : vector<8xf32>
    %107 = vector.multi_reduction <add>, %106, %cst_47 [1] : vector<8x32xf32> to vector<8xf32>
    %108 = vector.shape_cast %107 : vector<8xf32> to vector<8x1xf32>
    %cst_48 = arith.constant 3.200000e+01 : f32
    %109 = vector.broadcast %cst_48 : f32 to vector<8x1xf32>
    %110 = arith.divf %108, %109 : vector<8x1xf32>
    %111 = vector.broadcast %103 : vector<8x1xf32> to vector<8x32xf32>
    %112 = arith.subf %97, %111 : vector<8x32xf32>
    %cst_49 = arith.constant 9.99999997E-7 : f32
    %113 = vector.broadcast %cst_49 : f32 to vector<8x1xf32>
    %114 = arith.addf %110, %113 : vector<8x1xf32>
    %115 = math.rsqrt %114 : vector<8x1xf32>
    %116 = vector.broadcast %115 : vector<8x1xf32> to vector<8x32xf32>
    %117 = arith.mulf %112, %116 : vector<8x32xf32>
    %118 = vector.broadcast %98 : vector<1x32xf32> to vector<8x32xf32>
    %119 = arith.mulf %117, %118 : vector<8x32xf32>
    %120 = vector.broadcast %99 : vector<1x32xf32> to vector<8x32xf32>
    %121 = arith.addf %119, %120 : vector<8x32xf32>
    %c0_50 = arith.constant 0 : index
    %c0_51 = arith.constant 0 : index
    %122 = vector.load %arg15[%c0_50, %c0_51] : memref<8x32xf32, #tpu.memory_space<vmem>>, vector<8x32xf32>
    tpu.vector_store %arg15[%c0_50, %c0_51], %121 {strides = array<i32>} : memref<8x32xf32, #tpu.memory_space<vmem>>, vector<8x32xf32>,
    return
  }
  func.func @transform_0(%arg0: i32) -> (i32, i32) {
    %c0_i32 = arith.constant 0 : i32
    %c0_i32_0 = arith.constant 0 : i32
    return %arg0, %c0_i32 : i32, i32
  }
  func.func @transform_1(%arg0: i32) -> (i32, i32, i32) {
    %c0_i32 = arith.constant 0 : i32
    %c0_i32_0 = arith.constant 0 : i32
    %c0_i32_1 = arith.constant 0 : i32
    return %arg0, %c0_i32, %c0_i32_0 : i32, i32, i32
  }
  func.func @transform_2(%arg0: i32) -> (i32, i32) {
    %c0_i32 = arith.constant 0 : i32
    %c0_i32_0 = arith.constant 0 : i32
    %c0_i32_1 = arith.constant 0 : i32
    return %c0_i32, %c0_i32_0 : i32, i32
  }
  func.func @transform_3(%arg0: i32) -> (i32, i32) {
    %c0_i32 = arith.constant 0 : i32
    %c0_i32_0 = arith.constant 0 : i32
    %c0_i32_1 = arith.constant 0 : i32
    return %c0_i32, %c0_i32_0 : i32, i32
  }
  func.func @transform_4(%arg0: i32) -> (i32, i32) {
    %c0_i32 = arith.constant 0 : i32
    %c0_i32_0 = arith.constant 0 : i32
    %c0_i32_1 = arith.constant 0 : i32
    return %c0_i32, %c0_i32_0 : i32, i32
  }
  func.func @transform_5(%arg0: i32) -> (i32, i32) {
    %c0_i32 = arith.constant 0 : i32
    %c0_i32_0 = arith.constant 0 : i32
    %c0_i32_1 = arith.constant 0 : i32
    return %c0_i32, %c0_i32_0 : i32, i32
  }
  func.func @transform_6(%arg0: i32) -> (i32, i32) {
    %c0_i32 = arith.constant 0 : i32
    %c0_i32_0 = arith.constant 0 : i32
    %c0_i32_1 = arith.constant 0 : i32
    return %c0_i32, %c0_i32_0 : i32, i32
  }
  func.func @transform_7(%arg0: i32) -> (i32, i32) {
    %c0_i32 = arith.constant 0 : i32
    %c0_i32_0 = arith.constant 0 : i32
    %c0_i32_1 = arith.constant 0 : i32
    return %c0_i32, %c0_i32_0 : i32, i32
  }
  func.func @transform_8(%arg0: i32) -> (i32, i32) {
    %c0_i32 = arith.constant 0 : i32
    %c0_i32_0 = arith.constant 0 : i32
    %c0_i32_1 = arith.constant 0 : i32
    return %c0_i32, %c0_i32_0 : i32, i32
  }
  func.func @transform_9(%arg0: i32) -> (i32, i32) {
    %c0_i32 = arith.constant 0 : i32
    %c0_i32_0 = arith.constant 0 : i32
    %c0_i32_1 = arith.constant 0 : i32
    return %c0_i32, %c0_i32_0 : i32, i32
  }
  func.func @transform_10(%arg0: i32) -> (i32, i32) {
    %c0_i32 = arith.constant 0 : i32
    %c0_i32_0 = arith.constant 0 : i32
    %c0_i32_1 = arith.constant 0 : i32
    return %c0_i32, %c0_i32_0 : i32, i32
  }
  func.func @transform_11(%arg0: i32) -> (i32, i32) {
    %c0_i32 = arith.constant 0 : i32
    %c0_i32_0 = arith.constant 0 : i32
    %c0_i32_1 = arith.constant 0 : i32
    return %c0_i32, %c0_i32_0 : i32, i32
  }
  func.func @transform_12(%arg0: i32) -> (i32, i32) {
    %c0_i32 = arith.constant 0 : i32
    %c0_i32_0 = arith.constant 0 : i32
    %c0_i32_1 = arith.constant 0 : i32
    return %c0_i32, %c0_i32_0 : i32, i32
  }
  func.func @transform_13(%arg0: i32) -> (i32, i32) {
    %c0_i32 = arith.constant 0 : i32
    %c0_i32_0 = arith.constant 0 : i32
    %c0_i32_1 = arith.constant 0 : i32
    return %c0_i32, %c0_i32_0 : i32, i32
  }
  func.func @transform_14(%arg0: i32) -> (i32, i32) {
    %c0_i32 = arith.constant 0 : i32
    %c0_i32_0 = arith.constant 0 : i32
    return %arg0, %c0_i32 : i32, i32
  }
}

</mosaic_0001>

<llo_original>
// kernel: tpu_custom_call.1
$region0: #{tpu_custom_call.1}
  #allocation0 [shape = 'u32[]', space=smem, size = 0x4, offset = 0x4, fixed_abs, tag = 'smem constant byte address 0x4 - core index']
  #allocation1 [shape = 'u32[144,128]{1,0:T(1,128)}', space=vmem, size = 0x12000, scoped, tag = 'internal scratch']
  %s0 = inlined_call_operand.hbm [shape: f32[8,128], index: 0, kind: input, shape index: {}]
  %s1 = inlined_call_operand.hbm [shape: f32[16,128], index: 1, kind: output, shape index: {}]
  %s2 = sld [smem:[#allocation0]]
  $region41: #{tpu_custom_call.1} parent=0
    _
  %s4 = ssub.s32 1, %s2
  %s5 = scalar_select 0, %s4, %s2
  $region1: #{tpu_custom_call.1} parent=0
    #allocation2 [shape = 'u8[4096]{0}', space=vmem, size = 0x1000, scoped, tag = 'input window, operand 0, single buffered']
    #allocation3 [shape = 's32[2]{0}', space=sflag, size = 0x8, scoped, tag = 'scoped memory for tpu_custom_call.1']
    #allocation4 [shape = 's32[2]{0}', space=sflag, size = 0x8, scoped, tag = 'scoped memory for tpu_custom_call.1']
    #allocation5 [shape = 'u8[8192]{0}', space=vmem, size = 0x2000, scoped, tag = 'output window, operand 0']
    %6 = vsyncpa [#allocation3], 0
    %7 = vsyncpa [#allocation4], 0
    %s8 = scalar_lea.sflag [#allocation4], 1
    %9 = vsyncpa %s8, 0
    loop: start=0, step=1, limit=6
    $region2: #{tpu_custom_call.1} parent=1 // loop_pre_header
      _
    $region3: #{tpu_custom_call.1} parent=1 // loop_header
      %s11 = sphi 0, %s15
      %p12 = scmp.ge.s32.totalorder %s11, 6
      %s18 = sphi 0, %s30
      %s19 = sphi 0, %s26
      %s20 = sphi 0, %s18
      %s21 = sphi 0, %s19
      %s22 = sphi 0, %s20
      %s23 = sphi 0, %s21
      %s31 = sphi 0, %s31
      %s33 = sphi 0, %s31
      %s34 = sphi 0, %s33
      %s48 = sphi 0, %s34
      %s54 = sphi 0, %s56
      %s57 = sphi 0, %s54
      %s58 = sphi 0, %s57
      %s74 = sphi 0, %s58
    $region4: #{tpu_custom_call.1} parent=1 // loop_header_branch
      %14 = sbr.rel (%p12) target = $region8
    $region5: #{tpu_custom_call.1} parent=1 // loop_body
      %s16 = ssub.s32 %s11, 1
      %s17 = ssub.s32 %s11, 2
      %s24 = sadd.s32 1, %s19
      %p25 = scmp.ge.s32.totalorder %s24, 2
      %s26 = scalar_select %p25, 0, %s24
      %s27 = sadd.s32 1, %s18
      %s28 = scalar_select %p25, %s27, %s18
      %p29 = scmp.ge.s32.totalorder %s28, 2
      %s30 = scalar_select %p29, 0, %s28
      %s32 = sadd.s32 %s31, 1
      %p35 = scmp.eq.s32.totalorder %s11, 3
      %p36 = scmp.ne.s32.totalorder %s31, %s33
      %p37 = scmp.eq.s32.totalorder %s11, 0
      %p38 = por %p36, %p37
      %p39 = scmp.ne.s32.totalorder %s31, %s33
      %p40 = scmp.eq.s32.totalorder %s16, 3
      %p41 = por %p39, %p40
      %p42 = scmp.ne.s32.totalorder %s33, %s34
      %p43 = scmp.eq.s32.totalorder %s16, 0
      %p44 = por %p42, %p43
      %p45 = scmp.ne.s32.totalorder %s33, %s34
      %p46 = scmp.eq.s32.totalorder %s17, 3
      %p47 = por %p45, %p46
      %p49 = scmp.ne.s32.totalorder %s34, %s48
      %p50 = scmp.eq.s32.totalorder %s17, 0
      %p51 = por %p49, %p50
      %s52 = ssub.s32 %s18, %s30
      %p53 = scmp.eq.s32.totalorder %s52, 0
      %s55 = sadd.s32 %s54, 1
      %s56 = scalar_select %p53, %s54, %s55
      %p59 = pneg %p53
      %p60 = scmp.eq.s32.totalorder %s11, 3
      %p61 = por %p59, %p60
      %p62 = scmp.ne.s32.totalorder %s54, %s57
      %p63 = scmp.eq.s32.totalorder %s11, 0
      %p64 = por %p62, %p63
      %p65 = scmp.ne.s32.totalorder %s54, %s57
      %p66 = scmp.eq.s32.totalorder %s16, 3
      %p67 = por %p65, %p66
      %p68 = scmp.ne.s32.totalorder %s57, %s58
      %p69 = scmp.eq.s32.totalorder %s16, 0
      %p70 = por %p68, %p69
      %p71 = scmp.ne.s32.totalorder %s57, %s58
      %p72 = scmp.eq.s32.totalorder %s17, 3
      %p73 = por %p71, %p72
      %p75 = scmp.ne.s32.totalorder %s58, %s74
      %p76 = scmp.eq.s32.totalorder %s17, 0
      %p77 = por %p75, %p76
      %p78 = scmp.le.s32.totalorder 1, %s11
      %p79 = scmp.lt.s32.totalorder %s11, 5
      %p80 = pnand %p78, %p79
      %p81 = pneg %p80
      // Predicated region
      $region9: #{tpu_custom_call.1} parent=5 // pred_check
        _
      $region10: #{tpu_custom_call.1} parent=5 // pred_check_branch
        %83 = sbr.rel (%p80) target = $region12
      $region11: #{tpu_custom_call.1} parent=5 // pred_region
        %s84 = ssub.s32 %s11, 1
        // Predicated region
        $region13: #{tpu_custom_call.1} parent=11 // pred_check
          %p85 = pneg %p44
        $region14: #{tpu_custom_call.1} parent=11 // pred_check_branch
          %87 = sbr.rel (%p85) target = $region16
        $region15: #{tpu_custom_call.1} parent=11 // pred_region
          %s89 = ssub.s32 128, 128
          %90 = vsyncadd [#allocation3], %s89
          %s92 = sshll.u32 [#allocation2], 4
          %s93 = int_to_ptr.vmem [resolvable:$true] %s92
          %95 = dma.hbm_to_vmem [thread:$0]  %s0, 128, %s93, [#allocation3]
        $region16: #{tpu_custom_call.1} parent=11 // pred_fallthru
          _
      $region12: #{tpu_custom_call.1} parent=5 // pred_fallthru
        _
      %p96 = scmp.lt.s32.totalorder %s11, 4
      // Predicated region
      $region17: #{tpu_custom_call.1} parent=5 // pred_check
        %p97 = pneg %p96
      $region18: #{tpu_custom_call.1} parent=5 // pred_check_branch
        %99 = sbr.rel (%p97) target = $region20
      $region19: #{tpu_custom_call.1} parent=5 // pred_region
        _
      $region20: #{tpu_custom_call.1} parent=5 // pred_fallthru
        _
      %p100 = scmp.le.s32.totalorder 1, %s11
      %p101 = scmp.lt.s32.totalorder %s11, 5
      %p102 = pnand %p100, %p101
      %p103 = pneg %p102
      // Predicated region
      $region21: #{tpu_custom_call.1} parent=5 // pred_check
        _
      $region22: #{tpu_custom_call.1} parent=5 // pred_check_branch
        %105 = sbr.rel (%p102) target = $region24
      $region23: #{tpu_custom_call.1} parent=5 // pred_region
        %s106 = ssub.s32 %s11, 1
        // Predicated region
        $region25: #{tpu_custom_call.1} parent=23 // pred_check
          %p107 = pneg %p44
        $region26: #{tpu_custom_call.1} parent=23 // pred_check_branch
          %109 = sbr.rel (%p107) target = $region28
        $region27: #{tpu_custom_call.1} parent=23 // pred_region
          %110 = dma.done [#allocation3], 128
        $region28: #{tpu_custom_call.1} parent=23 // pred_fallthru
          _
        %p111 = pneg %p44
        %p112 = pneg %p41
        %p113 = pneg %p70
        %p114 = pneg %p67
        %s115 = sand.u32 %s57, 1
        %s116 = scalar_lea.sflag [#allocation4], %s115
        %s117 = sand.u32 %s57, 1
        %s118 = smul.addr %s117, 8
        %s119 = scalar_lea.vmem [#allocation5], %s118
        %v120 = vld [vmem:[#allocation2] sm:$0xff]
        %121 = vst [vmem:[%s119] sm:$0xff] %v120
        %s122 = sand.u32 %s57, 1
        %s123 = scalar_lea.sflag [#allocation4], %s122
        %s124 = sand.u32 %s57, 1
        %s125 = smul.addr %s124, 8
        %s126 = scalar_lea.vmem [#allocation5], %s125
        // Predicated region
        $region29: #{tpu_custom_call.1} parent=23 // pred_check
          %p127 = pneg %p67
        $region30: #{tpu_custom_call.1} parent=23 // pred_check_branch
          %129 = sbr.rel (%p127) target = $region32
        $region31: #{tpu_custom_call.1} parent=23 // pred_region
          %s131 = ssub.s32 128, 128
          %132 = vsyncadd %s123, %s131
          %s133 = smul.addr %s20, 128
          %s134 = scalar_lea.hbm %s1, %s133
          %s136 = sshll.u32 %s126, 4
          %s137 = int_to_ptr.vmem [resolvable:$true] %s136
          %139 = dma.vmem_to_hbm [thread:$0]  %s137, 128, %s134, %s123
        $region32: #{tpu_custom_call.1} parent=23 // pred_fallthru
          _
      $region24: #{tpu_custom_call.1} parent=5 // pred_fallthru
        _
      %p140 = scmp.le.s32.totalorder 2, %s11
      // Predicated region
      $region33: #{tpu_custom_call.1} parent=5 // pred_check
        %p141 = pneg %p140
      $region34: #{tpu_custom_call.1} parent=5 // pred_check_branch
        %143 = sbr.rel (%p141) target = $region36
      $region35: #{tpu_custom_call.1} parent=5 // pred_region
        %s144 = ssub.s32 %s11, 2
        // Predicated region
        $region37: #{tpu_custom_call.1} parent=35 // pred_check
          %p145 = pneg %p73
        $region38: #{tpu_custom_call.1} parent=35 // pred_check_branch
          %147 = sbr.rel (%p145) target = $region40
        $region39: #{tpu_custom_call.1} parent=35 // pred_region
          %s148 = sand.u32 %s58, 1
          %s149 = scalar_lea.sflag [#allocation4], %s148
          %s150 = sand.u32 %s58, 1
          %s151 = smul.addr %s150, 8
          %s152 = scalar_lea.vmem [#allocation5], %s151
          %153 = dma.done %s149, 128
        $region40: #{tpu_custom_call.1} parent=35 // pred_fallthru
          _
      $region36: #{tpu_custom_call.1} parent=5 // pred_fallthru
        _
    $region6: #{tpu_custom_call.1} parent=1 // loop_footer
      %s15 = sadd.s32 1, %s11
    $region7: #{tpu_custom_call.1} parent=1 // loop_footer_branch
      %10 = sbr.rel target = $region3
    $region8: #{tpu_custom_call.1} parent=1 // loop_exit
      _
    %154 = vsyncpa [#allocation3], 1
    %s155 = scalar_lea.sflag [#allocation3], 1
    %156 = vsyncpa %s155, 1
    %157 = vsyncpa [#allocation4], 1
    %s158 = scalar_lea.sflag [#allocation4], 1
    %159 = vsyncpa %s158, 1

// kernel: tpu_custom_call.1
$region0: #{tpu_custom_call.1}
  #allocation0 [shape = 'u32[]', space=smem, size = 0x4, offset = 0x4, fixed_abs, tag = 'smem constant byte address 0x4 - core index']
  #allocation1 [shape = 'u32[144,128]{1,0:T(1,128)}', space=vmem, size = 0x12000, scoped, tag = 'internal scratch']
  %s0 = inlined_call_operand.hbm [shape: f32[16,32], index: 0, kind: input, shape index: {}]
  %s1 = inlined_call_operand.hbm [shape: f32[2,8,8], index: 1, kind: input, shape index: {}]
  %s2 = inlined_call_operand.hbm [shape: bf16[32,96], index: 2, kind: input, shape index: {}]
  %s3 = inlined_call_operand.hbm [shape: f32[1,96], index: 3, kind: input, shape index: {}]
  %s4 = inlined_call_operand.hbm [shape: bf16[32,32], index: 4, kind: input, shape index: {}]
  %s5 = inlined_call_operand.hbm [shape: f32[1,32], index: 5, kind: input, shape index: {}]
  %s6 = inlined_call_operand.hbm [shape: f32[1,32], index: 6, kind: input, shape index: {}]
  %s7 = inlined_call_operand.hbm [shape: f32[1,32], index: 7, kind: input, shape index: {}]
  %s8 = inlined_call_operand.hbm [shape: bf16[32,64], index: 8, kind: input, shape index: {}]
  %s9 = inlined_call_operand.hbm [shape: f32[1,64], index: 9, kind: input, shape index: {}]
  %s10 = inlined_call_operand.hbm [shape: bf16[64,32], index: 10, kind: input, shape index: {}]
  %s11 = inlined_call_operand.hbm [shape: f32[1,32], index: 11, kind: input, shape index: {}]
  %s12 = inlined_call_operand.hbm [shape: f32[1,32], index: 12, kind: input, shape index: {}]
  %s13 = inlined_call_operand.hbm [shape: f32[1,32], index: 13, kind: input, shape index: {}]
  %s14 = inlined_call_operand.hbm [shape: f32[16,32], index: 14, kind: output, shape index: {}]
  %s15 = sld [smem:[#allocation0]]
  $region145: #{tpu_custom_call.1} parent=0
    _
  %s17 = ssub.s32 1, %s15
  %s18 = scalar_select 0, %s17, %s15
  $region1: #{tpu_custom_call.1} parent=0
    #allocation2 [shape = 'u8[8192]{0}', space=vmem, size = 0x2000, scoped, tag = 'input window, operand 0']
    #allocation3 [shape = 's32[2]{0}', space=sflag, size = 0x8, scoped, tag = 'scoped memory for tpu_custom_call.1']
    #allocation4 [shape = 's32[2]{0}', space=sflag, size = 0x8, scoped, tag = 'scoped memory for tpu_custom_call.1']
    #allocation5 [shape = 'u8[8192]{0}', space=vmem, size = 0x2000, scoped, tag = 'input window, operand 1']
    #allocation6 [shape = 's32[2]{0}', space=sflag, size = 0x8, scoped, tag = 'scoped memory for tpu_custom_call.1']
    #allocation7 [shape = 'u8[8192]{0}', space=vmem, size = 0x2000, scoped, tag = 'input window, operand 2, single buffered']
    #allocation8 [shape = 'u8[512]{0}', space=vmem, size = 0x400, scoped, tag = 'input window, operand 3, single buffered']
    #allocation9 [shape = 's32[1]{0}', space=sflag, size = 0x4, scoped, tag = 'scoped memory for tpu_custom_call.1']
    #allocation10 [shape = 'u8[8192]{0}', space=vmem, size = 0x2000, scoped, tag = 'input window, operand 4, single buffered']
    #allocation11 [shape = 'u8[512]{0}', space=vmem, size = 0x400, scoped, tag = 'input window, operand 5, single buffered']
    #allocation12 [shape = 's32[1]{0}', space=sflag, size = 0x4, scoped, tag = 'scoped memory for tpu_custom_call.1']
    #allocation13 [shape = 'u8[512]{0}', space=vmem, size = 0x400, scoped, tag = 'input window, operand 6, single buffered']
    #allocation14 [shape = 'u8[512]{0}', space=vmem, size = 0x400, scoped, tag = 'input window, operand 7, single buffered']
    #allocation15 [shape = 's32[1]{0}', space=sflag, size = 0x4, scoped, tag = 'scoped memory for tpu_custom_call.1']
    #allocation16 [shape = 'u8[8192]{0}', space=vmem, size = 0x2000, scoped, tag = 'input window, operand 8, single buffered']
    #allocation17 [shape = 'u8[512]{0}', space=vmem, size = 0x400, scoped, tag = 'input window, operand 9, single buffered']
    #allocation18 [shape = 's32[1]{0}', space=sflag, size = 0x4, scoped, tag = 'scoped memory for tpu_custom_call.1']
    #allocation19 [shape = 'u8[16384]{0}', space=vmem, size = 0x4000, scoped, tag = 'input window, operand 10, single buffered']
    #allocation20 [shape = 'u8[512]{0}', space=vmem, size = 0x400, scoped, tag = 'input window, operand 11, single buffered']
    #allocation21 [shape = 's32[1]{0}', space=sflag, size = 0x4, scoped, tag = 'scoped memory for tpu_custom_call.1']
    #allocation22 [shape = 'u8[512]{0}', space=vmem, size = 0x400, scoped, tag = 'input window, operand 12, single buffered']
    #allocation23 [shape = 'u8[512]{0}', space=vmem, size = 0x400, scoped, tag = 'input window, operand 13, single buffered']
    #allocation24 [shape = 's32[1]{0}', space=sflag, size = 0x4, scoped, tag = 'scoped memory for tpu_custom_call.1']
    #allocation25 [shape = 'u8[8192]{0}', space=vmem, size = 0x2000, scoped, tag = 'output window, operand 0']
    %19 = vsyncpa [#allocation3], 0
    %s20 = scalar_lea.sflag [#allocation3], 1
    %21 = vsyncpa %s20, 0
    %22 = vsyncpa [#allocation6], 0
    %s23 = scalar_lea.sflag [#allocation6], 1
    %24 = vsyncpa %s23, 0
    %25 = vsyncpa [#allocation9], 0
    %26 = vsyncpa [#allocation12], 0
    %27 = vsyncpa [#allocation15], 0
    %28 = vsyncpa [#allocation18], 0
    %29 = vsyncpa [#allocation21], 0
    %30 = vsyncpa [#allocation24], 0
    %31 = vsyncpa [#allocation4], 0
    %s32 = scalar_lea.sflag [#allocation4], 1
    %33 = vsyncpa %s32, 0
    loop: start=0, step=1, limit=4
    $region2: #{tpu_custom_call.1} parent=1 // loop_pre_header
      _
    $region3: #{tpu_custom_call.1} parent=1 // loop_header
      %s35 = sphi 0, %s39
      %p36 = scmp.ge.s32.totalorder %s35, 4
      %s45 = sphi 0, %s47
      %s48 = sphi 0, %s45
      %s49 = sphi 0, %s48
      %s65 = sphi 0, %s49
      %s71 = sphi 0, %s73
      %s74 = sphi 0, %s71
      %s75 = sphi 0, %s74
      %s91 = sphi 0, %s75
      %s95 = sphi 0, %s95
      %s97 = sphi 0, %s95
      %s98 = sphi 0, %s97
      %s112 = sphi 0, %s98
      %s116 = sphi 0, %s116
      %s118 = sphi 0, %s116
      %s119 = sphi 0, %s118
      %s133 = sphi 0, %s119
      %s137 = sphi 0, %s137
      %s139 = sphi 0, %s137
      %s140 = sphi 0, %s139
      %s154 = sphi 0, %s140
      %s158 = sphi 0, %s158
      %s160 = sphi 0, %s158
      %s161 = sphi 0, %s160
      %s175 = sphi 0, %s161
      %s179 = sphi 0, %s179
      %s181 = sphi 0, %s179
      %s182 = sphi 0, %s181
      %s196 = sphi 0, %s182
      %s200 = sphi 0, %s200
      %s202 = sphi 0, %s200
      %s203 = sphi 0, %s202
      %s217 = sphi 0, %s203
      %s221 = sphi 0, %s221
      %s223 = sphi 0, %s221
      %s224 = sphi 0, %s223
      %s238 = sphi 0, %s224
      %s242 = sphi 0, %s242
      %s244 = sphi 0, %s242
      %s245 = sphi 0, %s244
      %s259 = sphi 0, %s245
      %s263 = sphi 0, %s263
      %s265 = sphi 0, %s263
      %s266 = sphi 0, %s265
      %s280 = sphi 0, %s266
      %s284 = sphi 0, %s284
      %s286 = sphi 0, %s284
      %s287 = sphi 0, %s286
      %s301 = sphi 0, %s287
      %s305 = sphi 0, %s305
      %s307 = sphi 0, %s305
      %s308 = sphi 0, %s307
      %s322 = sphi 0, %s308
      %s326 = sphi 0, %s326
      %s328 = sphi 0, %s326
      %s329 = sphi 0, %s328
      %s343 = sphi 0, %s329
      %s349 = sphi 0, %s351
      %s352 = sphi 0, %s349
      %s353 = sphi 0, %s352
      %s369 = sphi 0, %s353
    $region4: #{tpu_custom_call.1} parent=1 // loop_header_branch
      %38 = sbr.rel (%p36) target = $region8
    $region5: #{tpu_custom_call.1} parent=1 // loop_body
      %s40 = ssub.s32 %s35, 1
      %s41 = ssub.s32 %s35, 2
      %s42 = sadd.s32 %s35, 1
      %s43 = ssub.s32 %s35, %s42
      %p44 = scmp.eq.s32.totalorder %s43, 0
      %s46 = sadd.s32 %s45, 1
      %s47 = scalar_select %p44, %s45, %s46
      %p50 = pneg %p44
      %p51 = scmp.eq.s32.totalorder %s35, 1
      %p52 = por %p50, %p51
      %p53 = scmp.ne.s32.totalorder %s45, %s48
      %p54 = scmp.eq.s32.totalorder %s35, 0
      %p55 = por %p53, %p54
      %p56 = scmp.ne.s32.totalorder %s45, %s48
      %p57 = scmp.eq.s32.totalorder %s40, 1
      %p58 = por %p56, %p57
      %p59 = scmp.ne.s32.totalorder %s48, %s49
      %p60 = scmp.eq.s32.totalorder %s40, 0
      %p61 = por %p59, %p60
      %p62 = scmp.ne.s32.totalorder %s48, %s49
      %p63 = scmp.eq.s32.totalorder %s41, 1
      %p64 = por %p62, %p63
      %p66 = scmp.ne.s32.totalorder %s49, %s65
      %p67 = scmp.eq.s32.totalorder %s41, 0
      %p68 = por %p66, %p67
      %s69 = ssub.s32 %s35, %s42
      %p70 = scmp.eq.s32.totalorder %s69, 0
      %s72 = sadd.s32 %s71, 1
      %s73 = scalar_select %p70, %s71, %s72
      %p76 = pneg %p70
      %p77 = scmp.eq.s32.totalorder %s35, 1
      %p78 = por %p76, %p77
      %p79 = scmp.ne.s32.totalorder %s71, %s74
      %p80 = scmp.eq.s32.totalorder %s35, 0
      %p81 = por %p79, %p80
      %p82 = scmp.ne.s32.totalorder %s71, %s74
      %p83 = scmp.eq.s32.totalorder %s40, 1
      %p84 = por %p82, %p83
      %p85 = scmp.ne.s32.totalorder %s74, %s75
      %p86 = scmp.eq.s32.totalorder %s40, 0
      %p87 = por %p85, %p86
      %p88 = scmp.ne.s32.totalorder %s74, %s75
      %p89 = scmp.eq.s32.totalorder %s41, 1
      %p90 = por %p88, %p89
      %p92 = scmp.ne.s32.totalorder %s75, %s91
      %p93 = scmp.eq.s32.totalorder %s41, 0
      %p94 = por %p92, %p93
      %s96 = sadd.s32 %s95, 1
      %p99 = scmp.eq.s32.totalorder %s35, 1
      %p100 = scmp.ne.s32.totalorder %s95, %s97
      %p101 = scmp.eq.s32.totalorder %s35, 0
      %p102 = por %p100, %p101
      %p103 = scmp.ne.s32.totalorder %s95, %s97
      %p104 = scmp.eq.s32.totalorder %s40, 1
      %p105 = por %p103, %p104
      %p106 = scmp.ne.s32.totalorder %s97, %s98
      %p107 = scmp.eq.s32.totalorder %s40, 0
      %p108 = por %p106, %p107
      %p109 = scmp.ne.s32.totalorder %s97, %s98
      %p110 = scmp.eq.s32.totalorder %s41, 1
      %p111 = por %p109, %p110
      %p113 = scmp.ne.s32.totalorder %s98, %s112
      %p114 = scmp.eq.s32.totalorder %s41, 0
      %p115 = por %p113, %p114
      %s117 = sadd.s32 %s116, 1
      %p120 = scmp.eq.s32.totalorder %s35, 1
      %p121 = scmp.ne.s32.totalorder %s116, %s118
      %p122 = scmp.eq.s32.totalorder %s35, 0
      %p123 = por %p121, %p122
      %p124 = scmp.ne.s32.totalorder %s116, %s118
      %p125 = scmp.eq.s32.totalorder %s40, 1
      %p126 = por %p124, %p125
      %p127 = scmp.ne.s32.totalorder %s118, %s119
      %p128 = scmp.eq.s32.totalorder %s40, 0
      %p129 = por %p127, %p128
      %p130 = scmp.ne.s32.totalorder %s118, %s119
      %p131 = scmp.eq.s32.totalorder %s41, 1
      %p132 = por %p130, %p131
      %p134 = scmp.ne.s32.totalorder %s119, %s133
      %p135 = scmp.eq.s32.totalorder %s41, 0
      %p136 = por %p134, %p135
      %s138 = sadd.s32 %s137, 1
      %p141 = scmp.eq.s32.totalorder %s35, 1
      %p142 = scmp.ne.s32.totalorder %s137, %s139
      %p143 = scmp.eq.s32.totalorder %s35, 0
      %p144 = por %p142, %p143
      %p145 = scmp.ne.s32.totalorder %s137, %s139
      %p146 = scmp.eq.s32.totalorder %s40, 1
      %p147 = por %p145, %p146
      %p148 = scmp.ne.s32.totalorder %s139, %s140
      %p149 = scmp.eq.s32.totalorder %s40, 0
      %p150 = por %p148, %p149
      %p151 = scmp.ne.s32.totalorder %s139, %s140
      %p152 = scmp.eq.s32.totalorder %s41, 1
      %p153 = por %p151, %p152
      %p155 = scmp.ne.s32.totalorder %s140, %s154
      %p156 = scmp.eq.s32.totalorder %s41, 0
      %p157 = por %p155, %p156
      %s159 = sadd.s32 %s158, 1
      %p162 = scmp.eq.s32.totalorder %s35, 1
      %p163 = scmp.ne.s32.totalorder %s158, %s160
      %p164 = scmp.eq.s32.totalorder %s35, 0
      %p165 = por %p163, %p164
      %p166 = scmp.ne.s32.totalorder %s158, %s160
      %p167 = scmp.eq.s32.totalorder %s40, 1
      %p168 = por %p166, %p167
      %p169 = scmp.ne.s32.totalorder %s160, %s161
      %p170 = scmp.eq.s32.totalorder %s40, 0
      %p171 = por %p169, %p170
      %p172 = scmp.ne.s32.totalorder %s160, %s161
      %p173 = scmp.eq.s32.totalorder %s41, 1
      %p174 = por %p172, %p173
      %p176 = scmp.ne.s32.totalorder %s161, %s175
      %p177 = scmp.eq.s32.totalorder %s41, 0
      %p178 = por %p176, %p177
      %s180 = sadd.s32 %s179, 1
      %p183 = scmp.eq.s32.totalorder %s35, 1
      %p184 = scmp.ne.s32.totalorder %s179, %s181
      %p185 = scmp.eq.s32.totalorder %s35, 0
      %p186 = por %p184, %p185
      %p187 = scmp.ne.s32.totalorder %s179, %s181
      %p188 = scmp.eq.s32.totalorder %s40, 1
      %p189 = por %p187, %p188
      %p190 = scmp.ne.s32.totalorder %s181, %s182
      %p191 = scmp.eq.s32.totalorder %s40, 0
      %p192 = por %p190, %p191
      %p193 = scmp.ne.s32.totalorder %s181, %s182
      %p194 = scmp.eq.s32.totalorder %s41, 1
      %p195 = por %p193, %p194
      %p197 = scmp.ne.s32.totalorder %s182, %s196
      %p198 = scmp.eq.s32.totalorder %s41, 0
      %p199 = por %p197, %p198
      %s201 = sadd.s32 %s200, 1
      %p204 = scmp.eq.s32.totalorder %s35, 1
      %p205 = scmp.ne.s32.totalorder %s200, %s202
      %p206 = scmp.eq.s32.totalorder %s35, 0
      %p207 = por %p205, %p206
      %p208 = scmp.ne.s32.totalorder %s200, %s202
      %p209 = scmp.eq.s32.totalorder %s40, 1
      %p210 = por %p208, %p209
      %p211 = scmp.ne.s32.totalorder %s202, %s203
      %p212 = scmp.eq.s32.totalorder %s40, 0
      %p213 = por %p211, %p212
      %p214 = scmp.ne.s32.totalorder %s202, %s203
      %p215 = scmp.eq.s32.totalorder %s41, 1
      %p216 = por %p214, %p215
      %p218 = scmp.ne.s32.totalorder %s203, %s217
      %p219 = scmp.eq.s32.totalorder %s41, 0
      %p220 = por %p218, %p219
      %s222 = sadd.s32 %s221, 1
      %p225 = scmp.eq.s32.totalorder %s35, 1
      %p226 = scmp.ne.s32.totalorder %s221, %s223
      %p227 = scmp.eq.s32.totalorder %s35, 0
      %p228 = por %p226, %p227
      %p229 = scmp.ne.s32.totalorder %s221, %s223
      %p230 = scmp.eq.s32.totalorder %s40, 1
      %p231 = por %p229, %p230
      %p232 = scmp.ne.s32.totalorder %s223, %s224
      %p233 = scmp.eq.s32.totalorder %s40, 0
      %p234 = por %p232, %p233
      %p235 = scmp.ne.s32.totalorder %s223, %s224
      %p236 = scmp.eq.s32.totalorder %s41, 1
      %p237 = por %p235, %p236
      %p239 = scmp.ne.s32.totalorder %s224, %s238
      %p240 = scmp.eq.s32.totalorder %s41, 0
      %p241 = por %p239, %p240
      %s243 = sadd.s32 %s242, 1
      %p246 = scmp.eq.s32.totalorder %s35, 1
      %p247 = scmp.ne.s32.totalorder %s242, %s244
      %p248 = scmp.eq.s32.totalorder %s35, 0
      %p249 = por %p247, %p248
      %p250 = scmp.ne.s32.totalorder %s242, %s244
      %p251 = scmp.eq.s32.totalorder %s40, 1
      %p252 = por %p250, %p251
      %p253 = scmp.ne.s32.totalorder %s244, %s245
      %p254 = scmp.eq.s32.totalorder %s40, 0
      %p255 = por %p253, %p254
      %p256 = scmp.ne.s32.totalorder %s244, %s245
      %p257 = scmp.eq.s32.totalorder %s41, 1
      %p258 = por %p256, %p257
      %p260 = scmp.ne.s32.totalorder %s245, %s259
      %p261 = scmp.eq.s32.totalorder %s41, 0
      %p262 = por %p260, %p261
      %s264 = sadd.s32 %s263, 1
      %p267 = scmp.eq.s32.totalorder %s35, 1
      %p268 = scmp.ne.s32.totalorder %s263, %s265
      %p269 = scmp.eq.s32.totalorder %s35, 0
      %p270 = por %p268, %p269
      %p271 = scmp.ne.s32.totalorder %s263, %s265
      %p272 = scmp.eq.s32.totalorder %s40, 1
      %p273 = por %p271, %p272
      %p274 = scmp.ne.s32.totalorder %s265, %s266
      %p275 = scmp.eq.s32.totalorder %s40, 0
      %p276 = por %p274, %p275
      %p277 = scmp.ne.s32.totalorder %s265, %s266
      %p278 = scmp.eq.s32.totalorder %s41, 1
      %p279 = por %p277, %p278
      %p281 = scmp.ne.s32.totalorder %s266, %s280
      %p282 = scmp.eq.s32.totalorder %s41, 0
      %p283 = por %p281, %p282
      %s285 = sadd.s32 %s284, 1
      %p288 = scmp.eq.s32.totalorder %s35, 1
      %p289 = scmp.ne.s32.totalorder %s284, %s286
      %p290 = scmp.eq.s32.totalorder %s35, 0
      %p291 = por %p289, %p290
      %p292 = scmp.ne.s32.totalorder %s284, %s286
      %p293 = scmp.eq.s32.totalorder %s40, 1
      %p294 = por %p292, %p293
      %p295 = scmp.ne.s32.totalorder %s286, %s287
      %p296 = scmp.eq.s32.totalorder %s40, 0
      %p297 = por %p295, %p296
      %p298 = scmp.ne.s32.totalorder %s286, %s287
      %p299 = scmp.eq.s32.totalorder %s41, 1
      %p300 = por %p298, %p299
      %p302 = scmp.ne.s32.totalorder %s287, %s301
      %p303 = scmp.eq.s32.totalorder %s41, 0
      %p304 = por %p302, %p303
      %s306 = sadd.s32 %s305, 1
      %p309 = scmp.eq.s32.totalorder %s35, 1
      %p310 = scmp.ne.s32.totalorder %s305, %s307
      %p311 = scmp.eq.s32.totalorder %s35, 0
      %p312 = por %p310, %p311
      %p313 = scmp.ne.s32.totalorder %s305, %s307
      %p314 = scmp.eq.s32.totalorder %s40, 1
      %p315 = por %p313, %p314
      %p316 = scmp.ne.s32.totalorder %s307, %s308
      %p317 = scmp.eq.s32.totalorder %s40, 0
      %p318 = por %p316, %p317
      %p319 = scmp.ne.s32.totalorder %s307, %s308
      %p320 = scmp.eq.s32.totalorder %s41, 1
      %p321 = por %p319, %p320
      %p323 = scmp.ne.s32.totalorder %s308, %s322
      %p324 = scmp.eq.s32.totalorder %s41, 0
      %p325 = por %p323, %p324
      %s327 = sadd.s32 %s326, 1
      %p330 = scmp.eq.s32.totalorder %s35, 1
      %p331 = scmp.ne.s32.totalorder %s326, %s328
      %p332 = scmp.eq.s32.totalorder %s35, 0
      %p333 = por %p331, %p332
      %p334 = scmp.ne.s32.totalorder %s326, %s328
      %p335 = scmp.eq.s32.totalorder %s40, 1
      %p336 = por %p334, %p335
      %p337 = scmp.ne.s32.totalorder %s328, %s329
      %p338 = scmp.eq.s32.totalorder %s40, 0
      %p339 = por %p337, %p338
      %p340 = scmp.ne.s32.totalorder %s328, %s329
      %p341 = scmp.eq.s32.totalorder %s41, 1
      %p342 = por %p340, %p341
      %p344 = scmp.ne.s32.totalorder %s329, %s343
      %p345 = scmp.eq.s32.totalorder %s41, 0
      %p346 = por %p344, %p345
      %s347 = ssub.s32 %s35, %s42
      %p348 = scmp.eq.s32.totalorder %s347, 0
      %s350 = sadd.s32 %s349, 1
      %s351 = scalar_select %p348, %s349, %s350
      %p354 = pneg %p348
      %p355 = scmp.eq.s32.totalorder %s35, 1
      %p356 = por %p354, %p355
      %p357 = scmp.ne.s32.totalorder %s349, %s352
      %p358 = scmp.eq.s32.totalorder %s35, 0
      %p359 = por %p357, %p358
      %p360 = scmp.ne.s32.totalorder %s349, %s352
      %p361 = scmp.eq.s32.totalorder %s40, 1
      %p362 = por %p360, %p361
      %p363 = scmp.ne.s32.totalorder %s352, %s353
      %p364 = scmp.eq.s32.totalorder %s40, 0
      %p365 = por %p363, %p364
      %p366 = scmp.ne.s32.totalorder %s352, %s353
      %p367 = scmp.eq.s32.totalorder %s41, 1
      %p368 = por %p366, %p367
      %p370 = scmp.ne.s32.totalorder %s353, %s369
      %p371 = scmp.eq.s32.totalorder %s41, 0
      %p372 = por %p370, %p371
      %p373 = scmp.le.s32.totalorder 1, %s35
      %p374 = scmp.lt.s32.totalorder %s35, 3
      %p375 = pnand %p373, %p374
      %p376 = pneg %p375
      // Predicated region
      $region9: #{tpu_custom_call.1} parent=5 // pred_check
        _
      $region10: #{tpu_custom_call.1} parent=5 // pred_check_branch
        %378 = sbr.rel (%p375) target = $region12
      $region11: #{tpu_custom_call.1} parent=5 // pred_region
        %s379 = ssub.s32 %s35, 1
        // Predicated region
        $region13: #{tpu_custom_call.1} parent=11 // pred_check
          %p380 = pneg %p108
        $region14: #{tpu_custom_call.1} parent=11 // pred_check_branch
          %382 = sbr.rel (%p380) target = $region16
        $region15: #{tpu_custom_call.1} parent=11 // pred_region
          %s384 = ssub.s32 256, 256
          %385 = vsyncadd [#allocation6], %s384
          %s386 = sshll.u32 [#allocation7], 4
          %s387 = int_to_ptr.vmem [resolvable:$true] %s386
          %392 = dma.hbm_to_vmem [thread:$0]  %s2, 256, %s387, [#allocation6], 64, 64, 4
        $region16: #{tpu_custom_call.1} parent=11 // pred_fallthru
          _
        // Predicated region
        $region17: #{tpu_custom_call.1} parent=11 // pred_check
          %p393 = pneg %p129
        $region18: #{tpu_custom_call.1} parent=11 // pred_check_branch
          %395 = sbr.rel (%p393) target = $region20
        $region19: #{tpu_custom_call.1} parent=11 // pred_region
          %s397 = ssub.s32 16, 16
          %398 = vsyncadd [#allocation9], %s397
          %s400 = sshll.u32 [#allocation8], 4
          %s401 = int_to_ptr.vmem [resolvable:$true] %s400
          %403 = dma.hbm_to_vmem [thread:$0]  %s3, 16, %s401, [#allocation9]
        $region20: #{tpu_custom_call.1} parent=11 // pred_fallthru
          _
        // Predicated region
        $region21: #{tpu_custom_call.1} parent=11 // pred_check
          %p404 = pneg %p150
        $region22: #{tpu_custom_call.1} parent=11 // pred_check_branch
          %406 = sbr.rel (%p404) target = $region24
        $region23: #{tpu_custom_call.1} parent=11 // pred_region
          %s408 = ssub.s32 256, 256
          %409 = vsyncadd [#allocation9], %s408
          %s410 = sshll.u32 [#allocation10], 4
          %s411 = int_to_ptr.vmem [resolvable:$true] %s410
          %416 = dma.hbm_to_vmem [thread:$0]  %s4, 256, %s411, [#allocation9], 64, 64, 4
        $region24: #{tpu_custom_call.1} parent=11 // pred_fallthru
          _
        // Predicated region
        $region25: #{tpu_custom_call.1} parent=11 // pred_check
          %p417 = pneg %p171
        $region26: #{tpu_custom_call.1} parent=11 // pred_check_branch
          %419 = sbr.rel (%p417) target = $region28
        $region27: #{tpu_custom_call.1} parent=11 // pred_region
          %s421 = ssub.s32 16, 16
          %422 = vsyncadd [#allocation12], %s421
          %s424 = sshll.u32 [#allocation11], 4
          %s425 = int_to_ptr.vmem [resolvable:$true] %s424
          %427 = dma.hbm_to_vmem [thread:$0]  %s5, 16, %s425, [#allocation12]
        $region28: #{tpu_custom_call.1} parent=11 // pred_fallthru
          _
        // Predicated region
        $region29: #{tpu_custom_call.1} parent=11 // pred_check
          %p428 = pneg %p192
        $region30: #{tpu_custom_call.1} parent=11 // pred_check_branch
          %430 = sbr.rel (%p428) target = $region32
        $region31: #{tpu_custom_call.1} parent=11 // pred_region
          %s432 = ssub.s32 16, 16
          %433 = vsyncadd [#allocation12], %s432
          %s435 = sshll.u32 [#allocation13], 4
          %s436 = int_to_ptr.vmem [resolvable:$true] %s435
          %438 = dma.hbm_to_vmem [thread:$0]  %s6, 16, %s436, [#allocation12]
        $region32: #{tpu_custom_call.1} parent=11 // pred_fallthru
          _
        // Predicated region
        $region33: #{tpu_custom_call.1} parent=11 // pred_check
          %p439 = pneg %p213
        $region34: #{tpu_custom_call.1} parent=11 // pred_check_branch
          %441 = sbr.rel (%p439) target = $region36
        $region35: #{tpu_custom_call.1} parent=11 // pred_region
          %s443 = ssub.s32 16, 16
          %444 = vsyncadd [#allocation15], %s443
          %s446 = sshll.u32 [#allocation14], 4
          %s447 = int_to_ptr.vmem [resolvable:$true] %s446
          %449 = dma.hbm_to_vmem [thread:$0]  %s7, 16, %s447, [#allocation15]
        $region36: #{tpu_custom_call.1} parent=11 // pred_fallthru
          _
        // Predicated region
        $region37: #{tpu_custom_call.1} parent=11 // pred_check
          %p450 = pneg %p234
        $region38: #{tpu_custom_call.1} parent=11 // pred_check_branch
          %452 = sbr.rel (%p450) target = $region40
        $region39: #{tpu_custom_call.1} parent=11 // pred_region
          %s454 = ssub.s32 256, 256
          %455 = vsyncadd [#allocation15], %s454
          %s456 = sshll.u32 [#allocation16], 4
          %s457 = int_to_ptr.vmem [resolvable:$true] %s456
          %462 = dma.hbm_to_vmem [thread:$0]  %s8, 256, %s457, [#allocation15], 64, 64, 4
        $region40: #{tpu_custom_call.1} parent=11 // pred_fallthru
          _
        // Predicated region
        $region41: #{tpu_custom_call.1} parent=11 // pred_check
          %p463 = pneg %p255
        $region42: #{tpu_custom_call.1} parent=11 // pred_check_branch
          %465 = sbr.rel (%p463) target = $region44
        $region43: #{tpu_custom_call.1} parent=11 // pred_region
          %s467 = ssub.s32 16, 16
          %468 = vsyncadd [#allocation18], %s467
          %s470 = sshll.u32 [#allocation17], 4
          %s471 = int_to_ptr.vmem [resolvable:$true] %s470
          %473 = dma.hbm_to_vmem [thread:$0]  %s9, 16, %s471, [#allocation18]
        $region44: #{tpu_custom_call.1} parent=11 // pred_fallthru
          _
        // Predicated region
        $region45: #{tpu_custom_call.1} parent=11 // pred_check
          %p474 = pneg %p276
        $region46: #{tpu_custom_call.1} parent=11 // pred_check_branch
          %476 = sbr.rel (%p474) target = $region48
        $region47: #{tpu_custom_call.1} parent=11 // pred_region
          %s478 = ssub.s32 512, 512
          %479 = vsyncadd [#allocation18], %s478
          %s480 = sshll.u32 [#allocation19], 4
          %s481 = int_to_ptr.vmem [resolvable:$true] %s480
          %486 = dma.hbm_to_vmem [thread:$0]  %s10, 512, %s481, [#allocation18], 64, 64, 4
        $region48: #{tpu_custom_call.1} parent=11 // pred_fallthru
          _
        // Predicated region
        $region49: #{tpu_custom_call.1} parent=11 // pred_check
          %p487 = pneg %p297
        $region50: #{tpu_custom_call.1} parent=11 // pred_check_branch
          %489 = sbr.rel (%p487) target = $region52
        $region51: #{tpu_custom_call.1} parent=11 // pred_region
          %s491 = ssub.s32 16, 16
          %492 = vsyncadd [#allocation21], %s491
          %s494 = sshll.u32 [#allocation20], 4
          %s495 = int_to_ptr.vmem [resolvable:$true] %s494
          %497 = dma.hbm_to_vmem [thread:$0]  %s11, 16, %s495, [#allocation21]
        $region52: #{tpu_custom_call.1} parent=11 // pred_fallthru
          _
        // Predicated region
        $region53: #{tpu_custom_call.1} parent=11 // pred_check
          %p498 = pneg %p318
        $region54: #{tpu_custom_call.1} parent=11 // pred_check_branch
          %500 = sbr.rel (%p498) target = $region56
        $region55: #{tpu_custom_call.1} parent=11 // pred_region
          %s502 = ssub.s32 16, 16
          %503 = vsyncadd [#allocation21], %s502
          %s505 = sshll.u32 [#allocation22], 4
          %s506 = int_to_ptr.vmem [resolvable:$true] %s505
          %508 = dma.hbm_to_vmem [thread:$0]  %s12, 16, %s506, [#allocation21]
        $region56: #{tpu_custom_call.1} parent=11 // pred_fallthru
          _
        // Predicated region
        $region57: #{tpu_custom_call.1} parent=11 // pred_check
          %p509 = pneg %p339
        $region58: #{tpu_custom_call.1} parent=11 // pred_check_branch
          %511 = sbr.rel (%p509) target = $region60
        $region59: #{tpu_custom_call.1} parent=11 // pred_region
          %s513 = ssub.s32 16, 16
          %514 = vsyncadd [#allocation24], %s513
          %s516 = sshll.u32 [#allocation23], 4
          %s517 = int_to_ptr.vmem [resolvable:$true] %s516
          %519 = dma.hbm_to_vmem [thread:$0]  %s13, 16, %s517, [#allocation24]
        $region60: #{tpu_custom_call.1} parent=11 // pred_fallthru
          _
      $region12: #{tpu_custom_call.1} parent=5 // pred_fallthru
        _
      %p520 = scmp.lt.s32.totalorder %s35, 2
      // Predicated region
      $region61: #{tpu_custom_call.1} parent=5 // pred_check
        %p521 = pneg %p520
      $region62: #{tpu_custom_call.1} parent=5 // pred_check_branch
        %523 = sbr.rel (%p521) target = $region64
      $region63: #{tpu_custom_call.1} parent=5 // pred_region
        // Predicated region
        $region65: #{tpu_custom_call.1} parent=63 // pred_check
          %p524 = pneg %p55
        $region66: #{tpu_custom_call.1} parent=63 // pred_check_branch
          %526 = sbr.rel (%p524) target = $region68
        $region67: #{tpu_custom_call.1} parent=63 // pred_region
          %s527 = sand.u32 %s45, 1
          %s528 = scalar_lea.sflag [#allocation3], %s527
          %s529 = sand.u32 %s45, 1
          %s530 = smul.addr %s529, 8
          %s531 = scalar_lea.vmem [#allocation2], %s530
          %s533 = ssub.s32 128, 128
          %534 = vsyncadd %s528, %s533
          %s535 = smul.addr %s35, 128
          %s536 = scalar_lea.hbm %s0, %s535
          %s538 = sshll.u32 %s531, 4
          %s539 = int_to_ptr.vmem [resolvable:$true] %s538
          %541 = dma.hbm_to_vmem [thread:$0]  %s536, 128, %s539, %s528
        $region68: #{tpu_custom_call.1} parent=63 // pred_fallthru
          _
        // Predicated region
        $region69: #{tpu_custom_call.1} parent=63 // pred_check
          %p542 = pneg %p81
        $region70: #{tpu_custom_call.1} parent=63 // pred_check_branch
          %544 = sbr.rel (%p542) target = $region72
        $region71: #{tpu_custom_call.1} parent=63 // pred_region
          %s545 = sand.u32 %s35, 1
          %s546 = scalar_lea.sflag [#allocation6], %s545
          %s547 = sand.u32 %s71, 1
          %s548 = smul.addr %s547, 8
          %s549 = scalar_lea.vmem [#allocation5], %s548
          %s551 = ssub.s32 128, 128
          %552 = vsyncadd %s546, %s551
          %s553 = smul.addr %s35, 128
          %s554 = scalar_lea.hbm %s1, %s553
          %s556 = sshll.u32 %s549, 4
          %s557 = int_to_ptr.vmem [resolvable:$true] %s556
          %559 = dma.hbm_to_vmem [thread:$0]  %s554, 128, %s557, %s546
        $region72: #{tpu_custom_call.1} parent=63 // pred_fallthru
          _
      $region64: #{tpu_custom_call.1} parent=5 // pred_fallthru
        _
      %p560 = scmp.le.s32.totalorder 1, %s35
      %p561 = scmp.lt.s32.totalorder %s35, 3
      %p562 = pnand %p560, %p561
      %p563 = pneg %p562
      // Predicated region
      $region73: #{tpu_custom_call.1} parent=5 // pred_check
        _
      $region74: #{tpu_custom_call.1} parent=5 // pred_check_branch
        %565 = sbr.rel (%p562) target = $region76
      $region75: #{tpu_custom_call.1} parent=5 // pred_region
        %s566 = ssub.s32 %s35, 1
        %s567 = sand.u32 %s48, 1
        %s568 = scalar_lea.sflag [#allocation3], %s567
        %s569 = sand.u32 %s48, 1
        %s570 = smul.addr %s569, 8
        %s571 = scalar_lea.vmem [#allocation2], %s570
        // Predicated region
        $region77: #{tpu_custom_call.1} parent=75 // pred_check
          %p572 = pneg %p61
        $region78: #{tpu_custom_call.1} parent=75 // pred_check_branch
          %574 = sbr.rel (%p572) target = $region80
        $region79: #{tpu_custom_call.1} parent=75 // pred_region
          %575 = dma.done %s568, 128
        $region80: #{tpu_custom_call.1} parent=75 // pred_fallthru
          _
        %s576 = sand.u32 %s40, 1
        %s577 = scalar_lea.sflag [#allocation6], %s576
        %s578 = sand.u32 %s74, 1
        %s579 = smul.addr %s578, 8
        %s580 = scalar_lea.vmem [#allocation5], %s579
        // Predicated region
        $region81: #{tpu_custom_call.1} parent=75 // pred_check
          %p581 = pneg %p87
        $region82: #{tpu_custom_call.1} parent=75 // pred_check_branch
          %583 = sbr.rel (%p581) target = $region84
        $region83: #{tpu_custom_call.1} parent=75 // pred_region
          %584 = dma.done %s577, 128
        $region84: #{tpu_custom_call.1} parent=75 // pred_fallthru
          _
        // Predicated region
        $region85: #{tpu_custom_call.1} parent=75 // pred_check
          %p585 = pneg %p108
        $region86: #{tpu_custom_call.1} parent=75 // pred_check_branch
          %587 = sbr.rel (%p585) target = $region88
        $region87: #{tpu_custom_call.1} parent=75 // pred_region
          %588 = dma.done [#allocation6], 256
        $region88: #{tpu_custom_call.1} parent=75 // pred_fallthru
          _
        // Predicated region
        $region89: #{tpu_custom_call.1} parent=75 // pred_check
          %p589 = pneg %p129
        $region90: #{tpu_custom_call.1} parent=75 // pred_check_branch
          %591 = sbr.rel (%p589) target = $region92
        $region91: #{tpu_custom_call.1} parent=75 // pred_region
          %592 = dma.done [#allocation9], 16
        $region92: #{tpu_custom_call.1} parent=75 // pred_fallthru
          _
        // Predicated region
        $region93: #{tpu_custom_call.1} parent=75 // pred_check
          %p593 = pneg %p150
        $region94: #{tpu_custom_call.1} parent=75 // pred_check_branch
          %595 = sbr.rel (%p593) target = $region96
        $region95: #{tpu_custom_call.1} parent=75 // pred_region
          %596 = dma.done [#allocation9], 256
        $region96: #{tpu_custom_call.1} parent=75 // pred_fallthru
          _
        // Predicated region
        $region97: #{tpu_custom_call.1} parent=75 // pred_check
          %p597 = pneg %p171
        $region98: #{tpu_custom_call.1} parent=75 // pred_check_branch
          %599 = sbr.rel (%p597) target = $region100
        $region99: #{tpu_custom_call.1} parent=75 // pred_region
          %600 = dma.done [#allocation12], 16
        $region100: #{tpu_custom_call.1} parent=75 // pred_fallthru
          _
        // Predicated region
        $region101: #{tpu_custom_call.1} parent=75 // pred_check
          %p601 = pneg %p192
        $region102: #{tpu_custom_call.1} parent=75 // pred_check_branch
          %603 = sbr.rel (%p601) target = $region104
        $region103: #{tpu_custom_call.1} parent=75 // pred_region
          %604 = dma.done [#allocation12], 16
        $region104: #{tpu_custom_call.1} parent=75 // pred_fallthru
          _
        // Predicated region
        $region105: #{tpu_custom_call.1} parent=75 // pred_check
          %p605 = pneg %p213
        $region106: #{tpu_custom_call.1} parent=75 // pred_check_branch
          %607 = sbr.rel (%p605) target = $region108
        $region107: #{tpu_custom_call.1} parent=75 // pred_region
          %608 = dma.done [#allocation15], 16
        $region108: #{tpu_custom_call.1} parent=75 // pred_fallthru
          _
        // Predicated region
        $region109: #{tpu_custom_call.1} parent=75 // pred_check
          %p609 = pneg %p234
        $region110: #{tpu_custom_call.1} parent=75 // pred_check_branch
          %611 = sbr.rel (%p609) target = $region112
        $region111: #{tpu_custom_call.1} parent=75 // pred_region
          %612 = dma.done [#allocation15], 256
        $region112: #{tpu_custom_call.1} parent=75 // pred_fallthru
          _
        // Predicated region
        $region113: #{tpu_custom_call.1} parent=75 // pred_check
          %p613 = pneg %p255
        $region114: #{tpu_custom_call.1} parent=75 // pred_check_branch
          %615 = sbr.rel (%p613) target = $region116
        $region115: #{tpu_custom_call.1} parent=75 // pred_region
          %616 = dma.done [#allocation18], 16
        $region116: #{tpu_custom_call.1} parent=75 // pred_fallthru
          _
        // Predicated region
        $region117: #{tpu_custom_call.1} parent=75 // pred_check
          %p617 = pneg %p276
        $region118: #{tpu_custom_call.1} parent=75 // pred_check_branch
          %619 = sbr.rel (%p617) target = $region120
        $region119: #{tpu_custom_call.1} parent=75 // pred_region
          %620 = dma.done [#allocation18], 512
        $region120: #{tpu_custom_call.1} parent=75 // pred_fallthru
          _
        // Predicated region
        $region121: #{tpu_custom_call.1} parent=75 // pred_check
          %p621 = pneg %p297
        $region122: #{tpu_custom_call.1} parent=75 // pred_check_branch
          %623 = sbr.rel (%p621) target = $region124
        $region123: #{tpu_custom_call.1} parent=75 // pred_region
          %624 = dma.done [#allocation21], 16
        $region124: #{tpu_custom_call.1} parent=75 // pred_fallthru
          _
        // Predicated region
        $region125: #{tpu_custom_call.1} parent=75 // pred_check
          %p625 = pneg %p318
        $region126: #{tpu_custom_call.1} parent=75 // pred_check_branch
          %627 = sbr.rel (%p625) target = $region128
        $region127: #{tpu_custom_call.1} parent=75 // pred_region
          %628 = dma.done [#allocation21], 16
        $region128: #{tpu_custom_call.1} parent=75 // pred_fallthru
          _
        // Predicated region
        $region129: #{tpu_custom_call.1} parent=75 // pred_check
          %p629 = pneg %p339
        $region130: #{tpu_custom_call.1} parent=75 // pred_check_branch
          %631 = sbr.rel (%p629) target = $region132
        $region131: #{tpu_custom_call.1} parent=75 // pred_region
          %632 = dma.done [#allocation24], 16
        $region132: #{tpu_custom_call.1} parent=75 // pred_fallthru
          _
        %s633 = sand.u32 %s48, 1
        %s634 = scalar_lea.sflag [#allocation3], %s633
        %s635 = sand.u32 %s48, 1
        %s636 = smul.addr %s635, 8
        %s637 = scalar_lea.vmem [#allocation2], %s636
        %p638 = pneg %p61
        %p639 = pneg %p58
        %s640 = sand.u32 %s40, 1
        %s641 = scalar_lea.sflag [#allocation6], %s640
        %s642 = sand.u32 %s74, 1
        %s643 = smul.addr %s642, 8
        %s644 = scalar_lea.vmem [#allocation5], %s643
        %p645 = pneg %p87
        %p646 = pneg %p84
        %p647 = pneg %p108
        %p648 = pneg %p105
        %p649 = pneg %p129
        %p650 = pneg %p126
        %p651 = pneg %p150
        %p652 = pneg %p147
        %p653 = pneg %p171
        %p654 = pneg %p168
        %p655 = pneg %p192
        %p656 = pneg %p189
        %p657 = pneg %p213
        %p658 = pneg %p210
        %p659 = pneg %p234
        %p660 = pneg %p231
        %p661 = pneg %p255
        %p662 = pneg %p252
        %p663 = pneg %p276
        %p664 = pneg %p273
        %p665 = pneg %p297
        %p666 = pneg %p294
        %p667 = pneg %p318
        %p668 = pneg %p315
        %p669 = pneg %p339
        %p670 = pneg %p336
        %p671 = pneg %p365
        %p672 = pneg %p362
        %s673 = sand.u32 %s352, 1
        %s674 = scalar_lea.sflag [#allocation4], %s673
        %s675 = sand.u32 %s352, 1
        %s676 = smul.addr %s675, 8
        %s677 = scalar_lea.vmem [#allocation25], %s676
        %v679 = vld [vmem:[%s571] sm:$0xff]
        %v680 = vpack.c.bf16 %v679, %v679
        %v681 = vld [vmem:[#allocation7] sm:$0xf]
        %v682 = vld [vmem:[#allocation7 + $0x4] sm:$0xf]
        %v683 = vld [vmem:[#allocation7 + $0x8] sm:$0xf]
        %v684 = vld [vmem:[#allocation7 + $0xc] sm:$0xf]
        %v685 = vld [vmem:[#allocation8] sm:$0x1]
        %v687 = vlaneseq
        %v688 = vshrl.u32 %v687, 7
        %v689 = vsub.s32 0, %v688
        %v690 = vrot.slane %v685, %v689
        %v696 = vunpack.c.l.b16 %v681
        %v697 = vunpack.c.l.b16 %v682
        %v698 = vunpack.c.l.b16 %v683
        %v699 = vunpack.c.l.b16 %v684
        %v700 = vpack.c.b16 %v697, %v696
        %v701 = vpack.c.b16 %v699, %v698
        %vm704 = vcmask 261120
        %v706 = vsel %vm704, %v680, 0
        %708 = vmatprep.subr.bf16.mxu0 0
        %709 = vmatpush1.bf16.msra.mxu0 %v700
        %710 = vmatprep.subr.bf16.mxu0 0
        %711 = vmatpush1.bf16.msra.mxu0 %v701
        %712 = vmatprep.subr.bf16.mxu0 0
        %713 = vmatpush1.bf16.msra.mxu0 0
        %714 = vmatprep.subr.bf16.mxu0 0
        %715 = vmatpush1.bf16.msra.mxu0 0
        %716 = vmatprep.subr.bf16.mxu0 0
        %717 = vmatpush1.bf16.msra.mxu0 0
        %718 = vmatprep.subr.bf16.mxu0 0
        %719 = vmatpush1.bf16.msra.mxu0 0
        %720 = vmatprep.subr.bf16.mxu0 0
        %721 = vmatpush1.bf16.msra.mxu0 0
        %722 = vmatprep.subr.bf16.mxu0 0
        %723 = vmatpush1.bf16.msra.mxu0 0
        %724 = vmatprep.subr.bf16.mxu0 0
        %725 = vmatpush1.bf16.msra.mxu0 0
        %726 = vmatprep.subr.bf16.mxu0 0
        %727 = vmatpush1.bf16.msra.mxu0 0
        %728 = vmatprep.subr.bf16.mxu0 0
        %729 = vmatpush1.bf16.msra.mxu0 0
        %730 = vmatprep.subr.bf16.mxu0 0
        %731 = vmatpush1.bf16.msra.mxu0 0
        %732 = vmatprep.subr.bf16.mxu0 0
        %733 = vmatpush1.bf16.msra.mxu0 0
        %734 = vmatprep.subr.bf16.mxu0 0
        %735 = vmatpush1.bf16.msra.mxu0 0
        %736 = vmatprep.subr.bf16.mxu0 0
        %737 = vmatpush1.bf16.msra.mxu0 0
        %738 = vmatprep.subr.bf16.mxu0 0
        %739 = vmatpush1.bf16.msra.mxu0 0
        %740 = vmatprep.mubr.bf16.mxu0 0
        %741 = vmatmul.mubr.bf16.gmra.mrb[0].mxu0 %v706
        %v742 = vpop.f32.mrb[0].mxu0
        %v743 = vadd.f32 %v690, %v742
        %v744 = vpop.f32.mrb[0].mxu0
        %v745 = vpop.f32.mrb[0].mxu0
        %v746 = vpop.f32.mrb[0].mxu0
        %747 = vdwg.mxu0
        %v748 = vld [vmem:[%s580] sm:$0xff]
        %v749 = vpack.c.bf16 %v743, %v743
        %751 = vrot.lane.b32.xlu0 %v749, 96
        %v752 = vpop.permute.xlu0 %751
        %vm753 = vcmask 130048
        %v755 = vsel %vm753, %v749, 0
        %v758 = vsel %vm753, %v752, 0
        %760 = vmatprep.subr.bf16.mxu0 0
        %761 = vmatpush1.bf16.xpose.msra.mxu0 %v758
        %762 = vmatprep.subr.bf16.mxu0 0
        %763 = vmatpush1.bf16.xpose.msra.mxu0 0
        %764 = vmatprep.subr.bf16.mxu0 0
        %765 = vmatpush1.bf16.xpose.msra.mxu0 0
        %766 = vmatprep.subr.bf16.mxu0 0
        %767 = vmatpush1.bf16.xpose.msra.mxu0 0
        %768 = vmatprep.subr.bf16.mxu0 0
        %769 = vmatpush1.bf16.xpose.msra.mxu0 0
        %770 = vmatprep.subr.bf16.mxu0 0
        %771 = vmatpush1.bf16.xpose.msra.mxu0 0
        %772 = vmatprep.subr.bf16.mxu0 0
        %773 = vmatpush1.bf16.xpose.msra.mxu0 0
        %774 = vmatprep.subr.bf16.mxu0 0
        %775 = vmatpush1.bf16.xpose.msra.mxu0 0
        %776 = vmatprep.subr.bf16.mxu0 0
        %777 = vmatpush1.bf16.xpose.msra.mxu0 0
        %778 = vmatprep.subr.bf16.mxu0 0
        %779 = vmatpush1.bf16.xpose.msra.mxu0 0
        %780 = vmatprep.subr.bf16.mxu0 0
        %781 = vmatpush1.bf16.xpose.msra.mxu0 0
        %782 = vmatprep.subr.bf16.mxu0 0
        %783 = vmatpush1.bf16.xpose.msra.mxu0 0
        %784 = vmatprep.subr.bf16.mxu0 0
        %785 = vmatpush1.bf16.xpose.msra.mxu0 0
        %786 = vmatprep.subr.bf16.mxu0 0
        %787 = vmatpush1.bf16.xpose.msra.mxu0 0
        %788 = vmatprep.subr.bf16.mxu0 0
        %789 = vmatpush1.bf16.xpose.msra.mxu0 0
        %790 = vmatprep.subr.bf16.mxu0 0
        %791 = vmatpush1.bf16.xpose.msra.mxu0 0
        %792 = vmatprep.mubr.bf16.mxu0 0
        %793 = vmatmul.mubr.bf16.gmra.mrb[0].mxu0 %v755
        %v794 = vpop.f32.mrb[0].mxu0
        %v795 = vadd.f32 0.0, %v794
        %v796 = vpop.f32.mrb[0].mxu0
        %v797 = vpop.f32.mrb[0].mxu0
        %v798 = vpop.f32.mrb[0].mxu0
        %799 = vdwg.mxu0
        %v800 = vmul.f32 %v795, 0.25
        %v801 = vadd.f32 %v800, %v748
        %802 = vrot.lane.b32.xlu0 %v749, 112
        %v803 = vpop.permute.xlu0 %802
        %804 = vrot.lane.b32.xlu0 %v749, 80
        %v805 = vpop.permute.xlu0 %804
        %v807 = vsel %vm753, %v803, 0
        %v810 = vsel %vm753, %v805, 0
        %812 = vmatprep.subr.bf16.mxu0 0
        %813 = vmatpush1.bf16.xpose.msra.mxu0 %v810
        %814 = vmatprep.subr.bf16.mxu0 0
        %815 = vmatpush1.bf16.xpose.msra.mxu0 0
        %816 = vmatprep.subr.bf16.mxu0 0
        %817 = vmatpush1.bf16.xpose.msra.mxu0 0
        %818 = vmatprep.subr.bf16.mxu0 0
        %819 = vmatpush1.bf16.xpose.msra.mxu0 0
        %820 = vmatprep.subr.bf16.mxu0 0
        %821 = vmatpush1.bf16.xpose.msra.mxu0 0
        %822 = vmatprep.subr.bf16.mxu0 0
        %823 = vmatpush1.bf16.xpose.msra.mxu0 0
        %824 = vmatprep.subr.bf16.mxu0 0
        %825 = vmatpush1.bf16.xpose.msra.mxu0 0
        %826 = vmatprep.subr.bf16.mxu0 0
        %827 = vmatpush1.bf16.xpose.msra.mxu0 0
        %828 = vmatprep.subr.bf16.mxu0 0
        %829 = vmatpush1.bf16.xpose.msra.mxu0 0
        %830 = vmatprep.subr.bf16.mxu0 0
        %831 = vmatpush1.bf16.xpose.msra.mxu0 0
        %832 = vmatprep.subr.bf16.mxu0 0
        %833 = vmatpush1.bf16.xpose.msra.mxu0 0
        %834 = vmatprep.subr.bf16.mxu0 0
        %835 = vmatpush1.bf16.xpose.msra.mxu0 0
        %836 = vmatprep.subr.bf16.mxu0 0
        %837 = vmatpush1.bf16.xpose.msra.mxu0 0
        %838 = vmatprep.subr.bf16.mxu0 0
        %839 = vmatpush1.bf16.xpose.msra.mxu0 0
        %840 = vmatprep.subr.bf16.mxu0 0
        %841 = vmatpush1.bf16.xpose.msra.mxu0 0
        %842 = vmatprep.subr.bf16.mxu0 0
        %843 = vmatpush1.bf16.xpose.msra.mxu0 0
        %844 = vmatprep.mubr.bf16.mxu0 0
        %845 = vmatmul.mubr.bf16.gmra.mrb[0].mxu0 %v807
        %v846 = vpop.f32.mrb[0].mxu0
        %v847 = vadd.f32 0.0, %v846
        %v848 = vpop.f32.mrb[0].mxu0
        %v849 = vpop.f32.mrb[0].mxu0
        %v850 = vpop.f32.mrb[0].mxu0
        %851 = vdwg.mxu0
        %v852 = vmul.f32 %v847, 0.25
        %v853 = vadd.f32 %v852, %v748
        %vm854 = vcmask 64512
        %v855 = vsel %vm854, %v801, -inf
        %856 = vmax.xlane.f32.xlu0 %v855
        %v857 = vpop.xlane.xlu0 %856
        %v858 = vsel %vm854, %v853, -inf
        %859 = vmax.xlane.f32.xlu0 %v858
        %v860 = vpop.xlane.xlu0 %859
        %v861 = vsub.f32 %v801, %v857
        %v862 = vsub.f32 %v853, %v860
        %v863 = vmul.f32 %v861, 1.442695
        %v864 = vpow.pop %v863
        %v865 = vmul.f32 %v862, 1.442695
        %v866 = vpow.pop %v865
        %v867 = vsel %vm854, %v864, 0.0
        %868 = vadd.xlane.f32.xlu0 %v867
        %v869 = vpop.xlane.xlu0 %868
        %v870 = vsel %vm854, %v866, 0.0
        %871 = vadd.xlane.f32.xlu0 %v870
        %v872 = vpop.xlane.xlu0 %871
        %v873 = vrcp.pop %v869
        %v874 = vrcp.pop %v872
        %v875 = vmul.f32 %v864, %v873
        %v876 = vmul.f32 %v866, %v874
        %v877 = vpack.c.bf16 %v875, %v875
        %878 = vrot.lane.b32.xlu0 %v749, 64
        %v879 = vpop.permute.xlu0 %878
        %v881 = vsel %vm854, %v877, 0
        %vm883 = vcmask 1043456
        %v885 = vsel %vm883, %v879, 0
        %887 = vmatprep.subr.bf16.mxu0 0
        %888 = vmatpush1.bf16.msra.mxu0 %v885
        %889 = vmatprep.subr.bf16.mxu0 0
        %890 = vmatpush1.bf16.msra.mxu0 0
        %891 = vmatprep.subr.bf16.mxu0 0
        %892 = vmatpush1.bf16.msra.mxu0 0
        %893 = vmatprep.subr.bf16.mxu0 0
        %894 = vmatpush1.bf16.msra.mxu0 0
        %895 = vmatprep.subr.bf16.mxu0 0
        %896 = vmatpush1.bf16.msra.mxu0 0
        %897 = vmatprep.subr.bf16.mxu0 0
        %898 = vmatpush1.bf16.msra.mxu0 0
        %899 = vmatprep.subr.bf16.mxu0 0
        %900 = vmatpush1.bf16.msra.mxu0 0
        %901 = vmatprep.subr.bf16.mxu0 0
        %902 = vmatpush1.bf16.msra.mxu0 0
        %903 = vmatprep.subr.bf16.mxu0 0
        %904 = vmatpush1.bf16.msra.mxu0 0
        %905 = vmatprep.subr.bf16.mxu0 0
        %906 = vmatpush1.bf16.msra.mxu0 0
        %907 = vmatprep.subr.bf16.mxu0 0
        %908 = vmatpush1.bf16.msra.mxu0 0
        %909 = vmatprep.subr.bf16.mxu0 0
        %910 = vmatpush1.bf16.msra.mxu0 0
        %911 = vmatprep.subr.bf16.mxu0 0
        %912 = vmatpush1.bf16.msra.mxu0 0
        %913 = vmatprep.subr.bf16.mxu0 0
        %914 = vmatpush1.bf16.msra.mxu0 0
        %915 = vmatprep.subr.bf16.mxu0 0
        %916 = vmatpush1.bf16.msra.mxu0 0
        %917 = vmatprep.subr.bf16.mxu0 0
        %918 = vmatpush1.bf16.msra.mxu0 0
        %919 = vmatprep.mubr.bf16.mxu0 0
        %920 = vmatmul.mubr.bf16.gmra.mrb[0].mxu0 %v881
        %v921 = vpop.f32.mrb[0].mxu0
        %v922 = vadd.f32 0.0, %v921
        %v923 = vpop.f32.mrb[0].mxu0
        %v924 = vpop.f32.mrb[0].mxu0
        %v925 = vpop.f32.mrb[0].mxu0
        %926 = vdwg.mxu0
        %v927 = vpack.c.bf16 %v876, %v876
        %928 = vrot.lane.b32.xlu0 %v749, 48
        %v929 = vpop.permute.xlu0 %928
        %v931 = vsel %vm854, %v927, 0
        %v934 = vsel %vm883, %v929, 0
        %936 = vmatprep.subr.bf16.mxu0 0
        %937 = vmatpush1.bf16.msra.mxu0 %v934
        %938 = vmatprep.subr.bf16.mxu0 0
        %939 = vmatpush1.bf16.msra.mxu0 0
        %940 = vmatprep.subr.bf16.mxu0 0
        %941 = vmatpush1.bf16.msra.mxu0 0
        %942 = vmatprep.subr.bf16.mxu0 0
        %943 = vmatpush1.bf16.msra.mxu0 0
        %944 = vmatprep.subr.bf16.mxu0 0
        %945 = vmatpush1.bf16.msra.mxu0 0
        %946 = vmatprep.subr.bf16.mxu0 0
        %947 = vmatpush1.bf16.msra.mxu0 0
        %948 = vmatprep.subr.bf16.mxu0 0
        %949 = vmatpush1.bf16.msra.mxu0 0
        %950 = vmatprep.subr.bf16.mxu0 0
        %951 = vmatpush1.bf16.msra.mxu0 0
        %952 = vmatprep.subr.bf16.mxu0 0
        %953 = vmatpush1.bf16.msra.mxu0 0
        %954 = vmatprep.subr.bf16.mxu0 0
        %955 = vmatpush1.bf16.msra.mxu0 0
        %956 = vmatprep.subr.bf16.mxu0 0
        %957 = vmatpush1.bf16.msra.mxu0 0
        %958 = vmatprep.subr.bf16.mxu0 0
        %959 = vmatpush1.bf16.msra.mxu0 0
        %960 = vmatprep.subr.bf16.mxu0 0
        %961 = vmatpush1.bf16.msra.mxu0 0
        %962 = vmatprep.subr.bf16.mxu0 0
        %963 = vmatpush1.bf16.msra.mxu0 0
        %964 = vmatprep.subr.bf16.mxu0 0
        %965 = vmatpush1.bf16.msra.mxu0 0
        %966 = vmatprep.subr.bf16.mxu0 0
        %967 = vmatpush1.bf16.msra.mxu0 0
        %968 = vmatprep.mubr.bf16.mxu0 0
        %969 = vmatmul.mubr.bf16.gmra.mrb[0].mxu0 %v931
        %v970 = vpop.f32.mrb[0].mxu0
        %v971 = vadd.f32 0.0, %v970
        %v972 = vpop.f32.mrb[0].mxu0
        %v973 = vpop.f32.mrb[0].mxu0
        %v974 = vpop.f32.mrb[0].mxu0
        %975 = vdwg.mxu0
        %977 = vrot.lane.b32.xlu0 %v971, 16
        %v978 = vpop.permute.xlu0 %977
        %v980 = vsel %vm753, %v922, %v978
        %v981 = vpack.c.bf16 %v980, %v980
        %v982 = vld [vmem:[#allocation10] sm:$0xf]
        %v983 = vld [vmem:[#allocation10 + $0x4] sm:$0xf]
        %v984 = vld [vmem:[#allocation10 + $0x8] sm:$0xf]
        %v985 = vld [vmem:[#allocation10 + $0xc] sm:$0xf]
        %v986 = vld [vmem:[#allocation11] sm:$0x1]
        %v988 = vlaneseq
        %v989 = vshrl.u32 %v988, 7
        %v990 = vsub.s32 0, %v989
        %v991 = vrot.slane %v986, %v990
        %v997 = vunpack.c.l.b16 %v982
        %v998 = vunpack.c.l.b16 %v983
        %v999 = vunpack.c.l.b16 %v984
        %v1000 = vunpack.c.l.b16 %v985
        %v1001 = vpack.c.b16 %v998, %v997
        %v1002 = vpack.c.b16 %v1000, %v999
        %v1006 = vsel %vm704, %v981, 0
        %1008 = vmatprep.subr.bf16.mxu0 0
        %1009 = vmatpush1.bf16.msra.mxu0 %v1001
        %1010 = vmatprep.subr.bf16.mxu0 0
        %1011 = vmatpush1.bf16.msra.mxu0 %v1002
        %1012 = vmatprep.subr.bf16.mxu0 0
        %1013 = vmatpush1.bf16.msra.mxu0 0
        %1014 = vmatprep.subr.bf16.mxu0 0
        %1015 = vmatpush1.bf16.msra.mxu0 0
        %1016 = vmatprep.subr.bf16.mxu0 0
        %1017 = vmatpush1.bf16.msra.mxu0 0
        %1018 = vmatprep.subr.bf16.mxu0 0
        %1019 = vmatpush1.bf16.msra.mxu0 0
        %1020 = vmatprep.subr.bf16.mxu0 0
        %1021 = vmatpush1.bf16.msra.mxu0 0
        %1022 = vmatprep.subr.bf16.mxu0 0
        %1023 = vmatpush1.bf16.msra.mxu0 0
        %1024 = vmatprep.subr.bf16.mxu0 0
        %1025 = vmatpush1.bf16.msra.mxu0 0
        %1026 = vmatprep.subr.bf16.mxu0 0
        %1027 = vmatpush1.bf16.msra.mxu0 0
        %1028 = vmatprep.subr.bf16.mxu0 0
        %1029 = vmatpush1.bf16.msra.mxu0 0
        %1030 = vmatprep.subr.bf16.mxu0 0
        %1031 = vmatpush1.bf16.msra.mxu0 0
        %1032 = vmatprep.subr.bf16.mxu0 0
        %1033 = vmatpush1.bf16.msra.mxu0 0
        %1034 = vmatprep.subr.bf16.mxu0 0
        %1035 = vmatpush1.bf16.msra.mxu0 0
        %1036 = vmatprep.subr.bf16.mxu0 0
        %1037 = vmatpush1.bf16.msra.mxu0 0
        %1038 = vmatprep.subr.bf16.mxu0 0
        %1039 = vmatpush1.bf16.msra.mxu0 0
        %1040 = vmatprep.mubr.bf16.mxu0 0
        %1041 = vmatmul.mubr.bf16.gmra.mrb[0].mxu0 %v1006
        %v1042 = vpop.f32.mrb[0].mxu0
        %v1043 = vadd.f32 %v991, %v1042
        %v1044 = vpop.f32.mrb[0].mxu0
        %v1045 = vpop.f32.mrb[0].mxu0
        %v1046 = vpop.f32.mrb[0].mxu0
        %1047 = vdwg.mxu0
        %v1048 = vadd.f32 %v679, %v1043
        %v1049 = vld [vmem:[#allocation13] sm:$0x1]
        %v1050 = vld [vmem:[#allocation14] sm:$0x1]
        %v1051 = vsel %vm704, %v1048, 0.0
        %1052 = vadd.xlane.f32.xlu0 %v1051
        %v1053 = vpop.xlane.xlu0 %1052
        %v1054 = vrcp.pop 32.0
        %v1055 = vmul.f32 %v1053, %v1054
        %v1056 = vsub.f32 %v1048, %v1055
        %v1057 = vmul.f32 %v1056, %v1056
        %v1058 = vsel %vm704, %v1057, 0.0
        %1059 = vadd.xlane.f32.xlu0 %v1058
        %v1060 = vpop.xlane.xlu0 %1059
        %v1061 = vmul.f32 %v1060, %v1054
        %v1062 = vadd.f32 %v1061, 1e-06
        %v1063 = vrsqrt.pop %v1062
        %v1064 = vmul.f32 %v1056, %v1063
        %v1066 = vlaneseq
        %v1067 = vshrl.u32 %v1066, 7
        %v1068 = vsub.s32 0, %v1067
        %v1069 = vrot.slane %v1049, %v1068
        %v1071 = vmul.f32 %v1064, %v1069
        %v1073 = vlaneseq
        %v1074 = vshrl.u32 %v1073, 7
        %v1075 = vsub.s32 0, %v1074
        %v1076 = vrot.slane %v1050, %v1075
        %v1078 = vadd.f32 %v1071, %v1076
        %v1079 = vpack.c.bf16 %v1078, %v1078
        %v1080 = vld [vmem:[#allocation16] sm:$0xf]
        %v1081 = vld [vmem:[#allocation16 + $0x4] sm:$0xf]
        %v1082 = vld [vmem:[#allocation16 + $0x8] sm:$0xf]
        %v1083 = vld [vmem:[#allocation16 + $0xc] sm:$0xf]
        %v1084 = vld [vmem:[#allocation17] sm:$0x1]
        %v1086 = vlaneseq
        %v1087 = vshrl.u32 %v1086, 7
        %v1088 = vsub.s32 0, %v1087
        %v1089 = vrot.slane %v1084, %v1088
        %v1095 = vunpack.c.l.b16 %v1080
        %v1096 = vunpack.c.l.b16 %v1081
        %v1097 = vunpack.c.l.b16 %v1082
        %v1098 = vunpack.c.l.b16 %v1083
        %v1099 = vpack.c.b16 %v1096, %v1095
        %v1100 = vpack.c.b16 %v1098, %v1097
        %v1104 = vsel %vm704, %v1079, 0
        %1106 = vmatprep.subr.bf16.mxu0 0
        %1107 = vmatpush1.bf16.msra.mxu0 %v1099
        %1108 = vmatprep.subr.bf16.mxu0 0
        %1109 = vmatpush1.bf16.msra.mxu0 %v1100
        %1110 = vmatprep.subr.bf16.mxu0 0
        %1111 = vmatpush1.bf16.msra.mxu0 0
        %1112 = vmatprep.subr.bf16.mxu0 0
        %1113 = vmatpush1.bf16.msra.mxu0 0
        %1114 = vmatprep.subr.bf16.mxu0 0
        %1115 = vmatpush1.bf16.msra.mxu0 0
        %1116 = vmatprep.subr.bf16.mxu0 0
        %1117 = vmatpush1.bf16.msra.mxu0 0
        %1118 = vmatprep.subr.bf16.mxu0 0
        %1119 = vmatpush1.bf16.msra.mxu0 0
        %1120 = vmatprep.subr.bf16.mxu0 0
        %1121 = vmatpush1.bf16.msra.mxu0 0
        %1122 = vmatprep.subr.bf16.mxu0 0
        %1123 = vmatpush1.bf16.msra.mxu0 0
        %1124 = vmatprep.subr.bf16.mxu0 0
        %1125 = vmatpush1.bf16.msra.mxu0 0
        %1126 = vmatprep.subr.bf16.mxu0 0
        %1127 = vmatpush1.bf16.msra.mxu0 0
        %1128 = vmatprep.subr.bf16.mxu0 0
        %1129 = vmatpush1.bf16.msra.mxu0 0
        %1130 = vmatprep.subr.bf16.mxu0 0
        %1131 = vmatpush1.bf16.msra.mxu0 0
        %1132 = vmatprep.subr.bf16.mxu0 0
        %1133 = vmatpush1.bf16.msra.mxu0 0
        %1134 = vmatprep.subr.bf16.mxu0 0
        %1135 = vmatpush1.bf16.msra.mxu0 0
        %1136 = vmatprep.subr.bf16.mxu0 0
        %1137 = vmatpush1.bf16.msra.mxu0 0
        %1138 = vmatprep.mubr.bf16.mxu0 0
        %1139 = vmatmul.mubr.bf16.gmra.mrb[0].mxu0 %v1104
        %v1140 = vpop.f32.mrb[0].mxu0
        %v1141 = vadd.f32 %v1089, %v1140
        %v1142 = vpop.f32.mrb[0].mxu0
        %v1143 = vpop.f32.mrb[0].mxu0
        %v1144 = vpop.f32.mrb[0].mxu0
        %1145 = vdwg.mxu0
        %v1146 = vmax.f32 %v1141, 0.0
        %v1147 = vpack.c.bf16 %v1146, %v1146
        %v1148 = vld [vmem:[#allocation19] sm:$0xf]
        %v1149 = vld [vmem:[#allocation19 + $0x4] sm:$0xf]
        %v1150 = vld [vmem:[#allocation19 + $0x8] sm:$0xf]
        %v1151 = vld [vmem:[#allocation19 + $0xc] sm:$0xf]
        %v1152 = vld [vmem:[#allocation19 + $0x10] sm:$0xf]
        %v1153 = vld [vmem:[#allocation19 + $0x14] sm:$0xf]
        %v1154 = vld [vmem:[#allocation19 + $0x18] sm:$0xf]
        %v1155 = vld [vmem:[#allocation19 + $0x1c] sm:$0xf]
        %v1156 = vld [vmem:[#allocation20] sm:$0x1]
        %v1158 = vlaneseq
        %v1159 = vshrl.u32 %v1158, 7
        %v1160 = vsub.s32 0, %v1159
        %v1161 = vrot.slane %v1156, %v1160
        %v1171 = vunpack.c.l.b16 %v1148
        %v1172 = vunpack.c.l.b16 %v1149
        %v1173 = vunpack.c.l.b16 %v1150
        %v1174 = vunpack.c.l.b16 %v1151
        %v1175 = vunpack.c.l.b16 %v1152
        %v1176 = vunpack.c.l.b16 %v1153
        %v1177 = vunpack.c.l.b16 %v1154
        %v1178 = vunpack.c.l.b16 %v1155
        %v1179 = vpack.c.b16 %v1172, %v1171
        %v1180 = vpack.c.b16 %v1174, %v1173
        %v1181 = vpack.c.b16 %v1176, %v1175
        %v1182 = vpack.c.b16 %v1178, %v1177
        %vm1187 = vcmask 523264
        %v1189 = vsel %vm1187, %v1147, 0
        %1191 = vmatprep.subr.bf16.mxu0 0
        %1192 = vmatpush1.bf16.msra.mxu0 %v1179
        %1193 = vmatprep.subr.bf16.mxu0 0
        %1194 = vmatpush1.bf16.msra.mxu0 %v1180
        %1195 = vmatprep.subr.bf16.mxu0 0
        %1196 = vmatpush1.bf16.msra.mxu0 %v1181
        %1197 = vmatprep.subr.bf16.mxu0 0
        %1198 = vmatpush1.bf16.msra.mxu0 %v1182
        %1199 = vmatprep.subr.bf16.mxu0 0
        %1200 = vmatpush1.bf16.msra.mxu0 0
        %1201 = vmatprep.subr.bf16.mxu0 0
        %1202 = vmatpush1.bf16.msra.mxu0 0
        %1203 = vmatprep.subr.bf16.mxu0 0
        %1204 = vmatpush1.bf16.msra.mxu0 0
        %1205 = vmatprep.subr.bf16.mxu0 0
        %1206 = vmatpush1.bf16.msra.mxu0 0
        %1207 = vmatprep.subr.bf16.mxu0 0
        %1208 = vmatpush1.bf16.msra.mxu0 0
        %1209 = vmatprep.subr.bf16.mxu0 0
        %1210 = vmatpush1.bf16.msra.mxu0 0
        %1211 = vmatprep.subr.bf16.mxu0 0
        %1212 = vmatpush1.bf16.msra.mxu0 0
        %1213 = vmatprep.subr.bf16.mxu0 0
        %1214 = vmatpush1.bf16.msra.mxu0 0
        %1215 = vmatprep.subr.bf16.mxu0 0
        %1216 = vmatpush1.bf16.msra.mxu0 0
        %1217 = vmatprep.subr.bf16.mxu0 0
        %1218 = vmatpush1.bf16.msra.mxu0 0
        %1219 = vmatprep.subr.bf16.mxu0 0
        %1220 = vmatpush1.bf16.msra.mxu0 0
        %1221 = vmatprep.subr.bf16.mxu0 0
        %1222 = vmatpush1.bf16.msra.mxu0 0
        %1223 = vmatprep.mubr.bf16.mxu0 0
        %1224 = vmatmul.mubr.bf16.gmra.mrb[0].mxu0 %v1189
        %v1225 = vpop.f32.mrb[0].mxu0
        %v1226 = vadd.f32 %v1161, %v1225
        %v1227 = vpop.f32.mrb[0].mxu0
        %v1228 = vpop.f32.mrb[0].mxu0
        %v1229 = vpop.f32.mrb[0].mxu0
        %1230 = vdwg.mxu0
        %v1231 = vadd.f32 %v1078, %v1226
        %v1232 = vld [vmem:[#allocation22] sm:$0x1]
        %v1233 = vld [vmem:[#allocation23] sm:$0x1]
        %v1234 = vsel %vm704, %v1231, 0.0
        %1235 = vadd.xlane.f32.xlu0 %v1234
        %v1236 = vpop.xlane.xlu0 %1235
        %v1237 = vmul.f32 %v1236, %v1054
        %v1238 = vsub.f32 %v1231, %v1237
        %v1239 = vmul.f32 %v1238, %v1238
        %v1240 = vsel %vm704, %v1239, 0.0
        %1241 = vadd.xlane.f32.xlu0 %v1240
        %v1242 = vpop.xlane.xlu0 %1241
        %v1243 = vmul.f32 %v1242, %v1054
        %v1244 = vadd.f32 %v1243, 1e-06
        %v1245 = vrsqrt.pop %v1244
        %v1246 = vmul.f32 %v1238, %v1245
        %v1248 = vlaneseq
        %v1249 = vshrl.u32 %v1248, 7
        %v1250 = vsub.s32 0, %v1249
        %v1251 = vrot.slane %v1232, %v1250
        %v1253 = vmul.f32 %v1246, %v1251
        %v1255 = vlaneseq
        %v1256 = vshrl.u32 %v1255, 7
        %v1257 = vsub.s32 0, %v1256
        %v1258 = vrot.slane %v1233, %v1257
        %v1260 = vadd.f32 %v1253, %v1258
        %1261 = vst.msk [vmem:[%s677] sm:$0xff] %vm704, %v1260
        %s1262 = sand.u32 %s352, 1
        %s1263 = scalar_lea.sflag [#allocation4], %s1262
        %s1264 = sand.u32 %s352, 1
        %s1265 = smul.addr %s1264, 8
        %s1266 = scalar_lea.vmem [#allocation25], %s1265
        // Predicated region
        $region133: #{tpu_custom_call.1} parent=75 // pred_check
          %p1267 = pneg %p362
        $region134: #{tpu_custom_call.1} parent=75 // pred_check_branch
          %1269 = sbr.rel (%p1267) target = $region136
        $region135: #{tpu_custom_call.1} parent=75 // pred_region
          %s1271 = ssub.s32 128, 128
          %1272 = vsyncadd %s1263, %s1271
          %s1273 = smul.addr %s40, 128
          %s1274 = scalar_lea.hbm %s14, %s1273
          %s1276 = sshll.u32 %s1266, 4
          %s1277 = int_to_ptr.vmem [resolvable:$true] %s1276
          %1279 = dma.vmem_to_hbm [thread:$0]  %s1277, 128, %s1274, %s1263
        $region136: #{tpu_custom_call.1} parent=75 // pred_fallthru
          _
      $region76: #{tpu_custom_call.1} parent=5 // pred_fallthru
        _
      %p1280 = scmp.le.s32.totalorder 2, %s35
      // Predicated region
      $region137: #{tpu_custom_call.1} parent=5 // pred_check
        %p1281 = pneg %p1280
      $region138: #{tpu_custom_call.1} parent=5 // pred_check_branch
        %1283 = sbr.rel (%p1281) target = $region140
      $region139: #{tpu_custom_call.1} parent=5 // pred_region
        %s1284 = ssub.s32 %s35, 2
        // Predicated region
        $region141: #{tpu_custom_call.1} parent=139 // pred_check
          %p1285 = pneg %p368
        $region142: #{tpu_custom_call.1} parent=139 // pred_check_branch
          %1287 = sbr.rel (%p1285) target = $region144
        $region143: #{tpu_custom_call.1} parent=139 // pred_region
          %s1288 = sand.u32 %s353, 1
          %s1289 = scalar_lea.sflag [#allocation4], %s1288
          %s1290 = sand.u32 %s353, 1
          %s1291 = smul.addr %s1290, 8
          %s1292 = scalar_lea.vmem [#allocation25], %s1291
          %1293 = dma.done %s1289, 128
        $region144: #{tpu_custom_call.1} parent=139 // pred_fallthru
          _
      $region140: #{tpu_custom_call.1} parent=5 // pred_fallthru
        _
    $region6: #{tpu_custom_call.1} parent=1 // loop_footer
      %s39 = sadd.s32 1, %s35
    $region7: #{tpu_custom_call.1} parent=1 // loop_footer_branch
      %34 = sbr.rel target = $region3
    $region8: #{tpu_custom_call.1} parent=1 // loop_exit
      _
    %1294 = vsyncpa [#allocation3], 1
    %s1295 = scalar_lea.sflag [#allocation3], 1
    %1296 = vsyncpa %s1295, 1
    %1297 = vsyncpa [#allocation6], 1
    %s1298 = scalar_lea.sflag [#allocation6], 1
    %1299 = vsyncpa %s1298, 1
    %1300 = vsyncpa [#allocation9], 1
    %1301 = vsyncpa [#allocation12], 1
    %1302 = vsyncpa [#allocation15], 1
    %1303 = vsyncpa [#allocation18], 1
    %1304 = vsyncpa [#allocation21], 1
    %1305 = vsyncpa [#allocation24], 1
    %1306 = vsyncpa [#allocation4], 1
    %s1307 = scalar_lea.sflag [#allocation4], 1
    %1308 = vsyncpa %s1307, 1

</llo_original>
